<compile_context>
chip_gen: v7x
topology: tpu7x:2x2x1
jax: 0.10.0
libtpu: 0.0.40
codegen_flags: <defaults>
</compile_context>

<pallas_src>
import functools
import math

import jax
import jax.numpy as jnp
from jax.experimental import pallas as pl
from jax.experimental.pallas import tpu as pltpu


def attention_kernel(x_ref, g_ref, wqkv_ref, wo_ref, bout_ref, o_ref,
                     *, heads, dim_head):
    # x_ref: (1, C, N) -- one batch element, channels-first tokens.
    x = x_ref[0].astype(jnp.float32)                       # (C, N)
    C = x.shape[0]
    H = heads * dim_head

    # RMSNorm over the channel (sublane) axis: F.normalize(x, dim=C) * g * sqrt(C)
    ssq = jnp.sum(x * x, axis=0, keepdims=True)            # (1, N)
    inv_norm = jax.lax.rsqrt(jnp.maximum(ssq, 1e-24))      # == 1 / max(||x||, 1e-12)
    xn = x * inv_norm * (g_ref[...].astype(jnp.float32) * (C ** 0.5))  # (C, N)
    xn_b = xn.astype(jnp.bfloat16)

    # to_qkv: 1x1 conv (no bias), channels-first => W(3H, C) @ xn(C, N).
    # Attention scale is already folded into the Q rows of wqkv (wrapper).
    qkv = jnp.dot(wqkv_ref[...], xn_b,
                  preferred_element_type=jnp.float32)      # (3H, N) f32

    # Start accumulator with residual + output bias.
    y = x + bout_ref[...].astype(jnp.float32)              # (C, N)

    for hh in range(heads):
        lo = hh * dim_head
        qh = qkv[lo:lo + dim_head].astype(jnp.bfloat16)                # (d, N)
        kh = qkv[H + lo:H + lo + dim_head].astype(jnp.bfloat16)        # (d, N)
        vh = qkv[2 * H + lo:2 * H + lo + dim_head].astype(jnp.bfloat16)

        # sim[i, j] = sum_d q[d, i] * k[d, j]   (q already scaled)
        sim = jax.lax.dot_general(qh, kh, (((0,), (0,)), ((), ())),
                                  preferred_element_type=jnp.float32)  # (N, N)
        sim = sim - jnp.max(sim, axis=-1, keepdims=True)
        p = jnp.exp(sim)
        denom = jnp.sum(p, axis=-1, keepdims=True)
        attn = (p * pl.reciprocal(denom, approx=True)).astype(jnp.bfloat16)

        # out_h[d, i] = sum_j v[d, j] * attn[i, j]
        out_h = jax.lax.dot_general(vh, attn, (((1,), (1,)), ((), ())),
                                    preferred_element_type=jnp.float32)  # (d, N)

        # Fused per-head output projection: y += Wo_h(C, d) @ out_h(d, N)
        y = y + jnp.dot(wo_ref[hh], out_h.astype(jnp.bfloat16),
                        preferred_element_type=jnp.float32)

    o_ref[0] = y.astype(o_ref.dtype)


def attention_forward(x_nchw, g, w_qkv, w_out, b_out, *, heads, dim_head):
    B, C, Hs, Ws = x_nchw.shape
    N = Hs * Ws
    hidden = heads * dim_head

    # Free reshape (no transpose): NCHW -> (B, C, N).
    x_bcn = x_nchw.reshape(B, C, N)

    # Parameter prep (trace-time, static):
    g_col = g.reshape(C, 1).astype(jnp.float32)
    b_col = b_out.reshape(C, 1).astype(jnp.float32)
    scale = dim_head ** (-0.5)
    w_qkv_s = jnp.concatenate(
        [w_qkv[:hidden].astype(jnp.float32) * scale,        # fold scale into Q
         w_qkv[hidden:].astype(jnp.float32)], axis=0).astype(jnp.bfloat16)  # (3H, C)
    # to_out weight (C, H) split per head: (heads, C, d)
    w_out_h = (w_out.astype(jnp.float32)
               .reshape(C, heads, dim_head)
               .transpose(1, 0, 2)
               .astype(jnp.bfloat16))

    kernel = functools.partial(attention_kernel, heads=heads, dim_head=dim_head)

    flops = B * (2 * N * C * 3 * hidden            # qkv projection
                 + heads * 2 * N * N * dim_head * 2  # qk^T and attn@v
                 + 2 * N * hidden * C)             # output projection
    transcendentals = B * heads * N * N
    bytes_accessed = (2 * B * C * N * 4            # x in + out
                      + (3 * hidden * C + heads * C * dim_head) * 2  # bf16 weights
                      + 2 * C * 4)                 # g, bias

    out_bcn = pl.pallas_call(
        kernel,
        out_shape=jax.ShapeDtypeStruct((B, C, N), x_nchw.dtype),
        grid_spec=pltpu.PrefetchScalarGridSpec(
            num_scalar_prefetch=0,
            grid=(B,),
            in_specs=[
                pl.BlockSpec((1, C, N), lambda b: (b, 0, 0)),              # x
                pl.BlockSpec((C, 1), lambda b: (0, 0)),                    # g
                pl.BlockSpec((3 * hidden, C), lambda b: (0, 0)),           # W_qkv (scaled, bf16)
                pl.BlockSpec((heads, C, dim_head), lambda b: (0, 0, 0)),   # W_out per head (bf16)
                pl.BlockSpec((C, 1), lambda b: (0, 0)),                    # b_out
            ],
            out_specs=pl.BlockSpec((1, C, N), lambda b: (b, 0, 0)),
        ),
        compiler_params=pltpu.CompilerParams(
            dimension_semantics=("parallel",)),
        cost_estimate=pl.CostEstimate(
            flops=flops, transcendentals=transcendentals,
            bytes_accessed=bytes_accessed),
    )(x_bcn, g_col, w_qkv_s, w_out_h, b_col)

    # Free reshape back to NCHW.
    return out_bcn.reshape(B, C, Hs, Ws)


def reference_forward(x, g, w_qkv, w_out, b_out, *, heads, dim_head):
    """Pure-JAX f32 reference mirroring the PyTorch forward."""
    B, C, Hs, Ws = x.shape
    N = Hs * Ws
    H = heads * dim_head
    x_f = x.reshape(B, C, N).astype(jnp.float32)
    l2 = jnp.sqrt(jnp.sum(x_f * x_f, axis=1, keepdims=True))
    xn = x_f / jnp.maximum(l2, 1e-12) * g.reshape(1, C, 1) * (C ** 0.5)
    qkv = jnp.einsum('oc,bcn->bon', w_qkv.astype(jnp.float32), xn)
    q, k, v = qkv[:, :H], qkv[:, H:2 * H], qkv[:, 2 * H:]

    def split(t):
        return t.reshape(B, heads, dim_head, N)

    q = split(q) * dim_head ** (-0.5)
    k, v = split(k), split(v)
    sim = jnp.einsum('bhdi,bhdj->bhij', q, k)
    attn = jax.nn.softmax(sim, axis=-1)
    out = jnp.einsum('bhij,bhdj->bhid', attn, v)            # (B, h, N, d)
    out = out.transpose(0, 1, 3, 2).reshape(B, H, N)        # 'b h (xy) d -> b (h d) (xy)'
    y = jnp.einsum('ch,bhn->bcn', w_out.astype(jnp.float32), out)
    y = y + b_out.reshape(1, C, 1) + x_f
    return y.reshape(B, C, Hs, Ws)


if __name__ == "__main__":
    # Small shapes: batch=2, dim (channels)=32, spatial 8x8, heads=4, dim_head=32
    B, DIM, HS, WS = 2, 32, 8, 8
    HEADS, DIM_HEAD = 4, 32
    HIDDEN = HEADS * DIM_HEAD

    key = jax.random.PRNGKey(0)
    kx, kqkv, kwo, kbo = jax.random.split(key, 4)

    x = jax.random.normal(kx, (B, DIM, HS, WS), dtype=jnp.float32)

    # Parameters (1x1 conv weights stored as 2-D matmuls, PyTorch layout).
    g = jnp.ones((DIM,), dtype=jnp.float32)                                 # RMSNorm gain
    w_qkv = jax.random.normal(kqkv, (3 * HIDDEN, DIM), jnp.float32) / math.sqrt(DIM)
    w_out = jax.random.normal(kwo, (DIM, HIDDEN), jnp.float32) / math.sqrt(HIDDEN)
    b_out = jax.random.normal(kbo, (DIM,), jnp.float32) * 0.01

    y = attention_forward(x, g, w_qkv, w_out, b_out, heads=HEADS, dim_head=DIM_HEAD)
    y = jax.block_until_ready(y)

    y_ref = reference_forward(x, g, w_qkv, w_out, b_out, heads=HEADS, dim_head=DIM_HEAD)
    assert y.shape == (B, DIM, HS, WS)

    # bf16 MXU inputs + approx reciprocal -> compare relative to output scale.
    err = float(jnp.max(jnp.abs(y - y_ref)))
    ref_scale = float(jnp.max(jnp.abs(y_ref)))
    assert err <= 3e-2 * ref_scale, f"max abs err {err} vs ref scale {ref_scale}"

    print("KERNEL_OK")
</pallas_src>

<mosaic_0001>
module attributes {stable_mosaic.version = 11 : i64} {
  func.func @attention_kernel(%arg0: i32, %arg1: memref<1x32x64xf32, #tpu.memory_space<vmem>>, %arg2: memref<32x1xf32, #tpu.memory_space<vmem>>, %arg3: memref<384x32xbf16, #tpu.memory_space<vmem>>, %arg4: memref<4x32x32xbf16, #tpu.memory_space<vmem>>, %arg5: memref<32x1xf32, #tpu.memory_space<vmem>>, %arg6: memref<1x32x64xf32, #tpu.memory_space<vmem>>) attributes {dimension_semantics = [#tpu.dimension_semantics<parallel>], iteration_bounds = array<i64: 2>, scalar_prefetch = 0 : i64, scratch_operands = 0 : i64, tpu.core_type = #tpu.core_type<tc>, window_params = [{transform_indices = @transform_0, window_bounds = array<i64: 1, 32, 64>}, {pipeline_mode = #tpu.pipeline_mode<synchronous>, transform_indices = @transform_1, window_bounds = array<i64: 32, 1>}, {pipeline_mode = #tpu.pipeline_mode<synchronous>, transform_indices = @transform_2, window_bounds = array<i64: 384, 32>}, {pipeline_mode = #tpu.pipeline_mode<synchronous>, transform_indices = @transform_3, window_bounds = array<i64: 4, 32, 32>}, {pipeline_mode = #tpu.pipeline_mode<synchronous>, transform_indices = @transform_4, window_bounds = array<i64: 32, 1>}, {transform_indices = @transform_5, window_bounds = array<i64: 1, 32, 64>}]} {
    %c0 = arith.constant 0 : index
    %c0_0 = arith.constant 0 : index
    %c0_1 = arith.constant 0 : index
    %0 = vector.load %arg1[%c0, %c0_0, %c0_1] : memref<1x32x64xf32, #tpu.memory_space<vmem>>, vector<1x32x64xf32>
    %1 = vector.shape_cast %0 : vector<1x32x64xf32> to vector<32x64xf32>
    %2 = arith.mulf %1, %1 : vector<32x64xf32>
    %cst = arith.constant dense<0.000000e+00> : vector<64xf32>
    %3 = vector.multi_reduction <add>, %2, %cst [0] : vector<32x64xf32> to vector<64xf32>
    %4 = vector.shape_cast %3 : vector<64xf32> to vector<1x64xf32>
    %cst_2 = arith.constant 1.000000e-24 : f32
    %5 = vector.broadcast %cst_2 : f32 to vector<1x64xf32>
    %6 = arith.maximumf %4, %5 : vector<1x64xf32>
    %7 = math.rsqrt %6 : vector<1x64xf32>
    %8 = vector.broadcast %7 : vector<1x64xf32> to vector<32x64xf32>
    %9 = arith.mulf %1, %8 : vector<32x64xf32>
    %c0_3 = arith.constant 0 : index
    %c0_4 = arith.constant 0 : index
    %10 = vector.load %arg2[%c0_3, %c0_4] : memref<32x1xf32, #tpu.memory_space<vmem>>, vector<32x1xf32>
    %cst_5 = arith.constant 5.65685415 : f32
    %11 = vector.broadcast %cst_5 : f32 to vector<32x1xf32>
    %12 = arith.mulf %10, %11 : vector<32x1xf32>
    %13 = vector.broadcast %12 : vector<32x1xf32> to vector<32x64xf32>
    %14 = arith.mulf %9, %13 : vector<32x64xf32>
    %15 = arith.truncf %14 : vector<32x64xf32> to vector<32x64xbf16>
    %c0_6 = arith.constant 0 : index
    %c0_7 = arith.constant 0 : index
    %16 = vector.load %arg3[%c0_6, %c0_7] : memref<384x32xbf16, #tpu.memory_space<vmem>>, vector<384x32xbf16>
    %cst_8 = arith.constant dense<0.000000e+00> : vector<384x64xf32>
    %17 = tpu.matmul %16, %15, %cst_8 {dimension_numbers = #tpu.dot_dimension_numbers<[1], [0], [0], [1], [0, 0, 1, 1], [], []>} : vector<384x32xbf16>, vector<32x64xbf16>, vector<384x64xf32> -> vector<384x64xf32>
    %c0_9 = arith.constant 0 : index
    %c0_10 = arith.constant 0 : index
    %18 = vector.load %arg5[%c0_9, %c0_10] : memref<32x1xf32, #tpu.memory_space<vmem>>, vector<32x1xf32>
    %19 = vector.broadcast %18 : vector<32x1xf32> to vector<32x64xf32>
    %20 = arith.addf %1, %19 : vector<32x64xf32>
    %21 = vector.extract_strided_slice %17 {offsets = [0, 0], sizes = [32, 64], strides = [1, 1]} : vector<384x64xf32> to vector<32x64xf32>
    %22 = arith.truncf %21 : vector<32x64xf32> to vector<32x64xbf16>
    %23 = vector.extract_strided_slice %17 {offsets = [128, 0], sizes = [32, 64], strides = [1, 1]} : vector<384x64xf32> to vector<32x64xf32>
    %24 = arith.truncf %23 : vector<32x64xf32> to vector<32x64xbf16>
    %25 = vector.extract_strided_slice %17 {offsets = [256, 0], sizes = [32, 64], strides = [1, 1]} : vector<384x64xf32> to vector<32x64xf32>
    %26 = arith.truncf %25 : vector<32x64xf32> to vector<32x64xbf16>
    %cst_11 = arith.constant dense<0.000000e+00> : vector<64x64xf32>
    %27 = tpu.matmul %22, %24, %cst_11 {dimension_numbers = #tpu.dot_dimension_numbers<[0], [0], [1], [1], [0, 1, 1, 1], [], []>} : vector<32x64xbf16>, vector<32x64xbf16>, vector<64x64xf32> -> vector<64x64xf32>
    %cst_12 = arith.constant dense<0xFF800000> : vector<64xf32>
    %28 = vector.multi_reduction <maximumf>, %27, %cst_12 [1] : vector<64x64xf32> to vector<64xf32>
    %29 = vector.shape_cast %28 : vector<64xf32> to vector<64x1xf32>
    %30 = vector.broadcast %29 : vector<64x1xf32> to vector<64x64xf32>
    %31 = arith.subf %27, %30 : vector<64x64xf32>
    %32 = math.exp %31 : vector<64x64xf32>
    %cst_13 = arith.constant dense<0.000000e+00> : vector<64xf32>
    %33 = vector.multi_reduction <add>, %32, %cst_13 [1] : vector<64x64xf32> to vector<64xf32>
    %34 = vector.shape_cast %33 : vector<64xf32> to vector<64x1xf32>
    %35 = tpu.reciprocal %34 {approx = true} : vector<64x1xf32> -> vector<64x1xf32>
    %36 = vector.broadcast %35 : vector<64x1xf32> to vector<64x64xf32>
    %37 = arith.mulf %32, %36 : vector<64x64xf32>
    %38 = arith.truncf %37 : vector<64x64xf32> to vector<64x64xbf16>
    %cst_14 = arith.constant dense<0.000000e+00> : vector<32x64xf32>
    %39 = tpu.matmul %26, %38, %cst_14 {dimension_numbers = #tpu.dot_dimension_numbers<[1], [1], [0], [0], [0, 0, 1, 0], [], []>} : vector<32x64xbf16>, vector<64x64xbf16>, vector<32x64xf32> -> vector<32x64xf32>
    %c0_15 = arith.constant 0 : index
    %c0_16 = arith.constant 0 : index
    %c0_17 = arith.constant 0 : index
    %40 = vector.load %arg4[%c0_15, %c0_16, %c0_17] : memref<4x32x32xbf16, #tpu.memory_space<vmem>>, vector<1x32x32xbf16>
    %41 = vector.shape_cast %40 : vector<1x32x32xbf16> to vector<32x32xbf16>
    %42 = arith.truncf %39 : vector<32x64xf32> to vector<32x64xbf16>
    %cst_18 = arith.constant dense<0.000000e+00> : vector<32x64xf32>
    %43 = tpu.matmul %41, %42, %cst_18 {dimension_numbers = #tpu.dot_dimension_numbers<[1], [0], [0], [1], [0, 0, 1, 1], [], []>} : vector<32x32xbf16>, vector<32x64xbf16>, vector<32x64xf32> -> vector<32x64xf32>
    %44 = arith.addf %20, %43 : vector<32x64xf32>
    %45 = vector.extract_strided_slice %17 {offsets = [32, 0], sizes = [32, 64], strides = [1, 1]} : vector<384x64xf32> to vector<32x64xf32>
    %46 = arith.truncf %45 : vector<32x64xf32> to vector<32x64xbf16>
    %47 = vector.extract_strided_slice %17 {offsets = [160, 0], sizes = [32, 64], strides = [1, 1]} : vector<384x64xf32> to vector<32x64xf32>
    %48 = arith.truncf %47 : vector<32x64xf32> to vector<32x64xbf16>
    %49 = vector.extract_strided_slice %17 {offsets = [288, 0], sizes = [32, 64], strides = [1, 1]} : vector<384x64xf32> to vector<32x64xf32>
    %50 = arith.truncf %49 : vector<32x64xf32> to vector<32x64xbf16>
    %cst_19 = arith.constant dense<0.000000e+00> : vector<64x64xf32>
    %51 = tpu.matmul %46, %48, %cst_19 {dimension_numbers = #tpu.dot_dimension_numbers<[0], [0], [1], [1], [0, 1, 1, 1], [], []>} : vector<32x64xbf16>, vector<32x64xbf16>, vector<64x64xf32> -> vector<64x64xf32>
    %cst_20 = arith.constant dense<0xFF800000> : vector<64xf32>
    %52 = vector.multi_reduction <maximumf>, %51, %cst_20 [1] : vector<64x64xf32> to vector<64xf32>
    %53 = vector.shape_cast %52 : vector<64xf32> to vector<64x1xf32>
    %54 = vector.broadcast %53 : vector<64x1xf32> to vector<64x64xf32>
    %55 = arith.subf %51, %54 : vector<64x64xf32>
    %56 = math.exp %55 : vector<64x64xf32>
    %cst_21 = arith.constant dense<0.000000e+00> : vector<64xf32>
    %57 = vector.multi_reduction <add>, %56, %cst_21 [1] : vector<64x64xf32> to vector<64xf32>
    %58 = vector.shape_cast %57 : vector<64xf32> to vector<64x1xf32>
    %59 = tpu.reciprocal %58 {approx = true} : vector<64x1xf32> -> vector<64x1xf32>
    %60 = vector.broadcast %59 : vector<64x1xf32> to vector<64x64xf32>
    %61 = arith.mulf %56, %60 : vector<64x64xf32>
    %62 = arith.truncf %61 : vector<64x64xf32> to vector<64x64xbf16>
    %cst_22 = arith.constant dense<0.000000e+00> : vector<32x64xf32>
    %63 = tpu.matmul %50, %62, %cst_22 {dimension_numbers = #tpu.dot_dimension_numbers<[1], [1], [0], [0], [0, 0, 1, 0], [], []>} : vector<32x64xbf16>, vector<64x64xbf16>, vector<32x64xf32> -> vector<32x64xf32>
    %c1 = arith.constant 1 : index
    %c0_23 = arith.constant 0 : index
    %c0_24 = arith.constant 0 : index
    %64 = vector.load %arg4[%c1, %c0_23, %c0_24] : memref<4x32x32xbf16, #tpu.memory_space<vmem>>, vector<1x32x32xbf16>
    %65 = vector.shape_cast %64 : vector<1x32x32xbf16> to vector<32x32xbf16>
    %66 = arith.truncf %63 : vector<32x64xf32> to vector<32x64xbf16>
    %cst_25 = arith.constant dense<0.000000e+00> : vector<32x64xf32>
    %67 = tpu.matmul %65, %66, %cst_25 {dimension_numbers = #tpu.dot_dimension_numbers<[1], [0], [0], [1], [0, 0, 1, 1], [], []>} : vector<32x32xbf16>, vector<32x64xbf16>, vector<32x64xf32> -> vector<32x64xf32>
    %68 = arith.addf %44, %67 : vector<32x64xf32>
    %69 = vector.extract_strided_slice %17 {offsets = [64, 0], sizes = [32, 64], strides = [1, 1]} : vector<384x64xf32> to vector<32x64xf32>
    %70 = arith.truncf %69 : vector<32x64xf32> to vector<32x64xbf16>
    %71 = vector.extract_strided_slice %17 {offsets = [192, 0], sizes = [32, 64], strides = [1, 1]} : vector<384x64xf32> to vector<32x64xf32>
    %72 = arith.truncf %71 : vector<32x64xf32> to vector<32x64xbf16>
    %73 = vector.extract_strided_slice %17 {offsets = [320, 0], sizes = [32, 64], strides = [1, 1]} : vector<384x64xf32> to vector<32x64xf32>
    %74 = arith.truncf %73 : vector<32x64xf32> to vector<32x64xbf16>
    %cst_26 = arith.constant dense<0.000000e+00> : vector<64x64xf32>
    %75 = tpu.matmul %70, %72, %cst_26 {dimension_numbers = #tpu.dot_dimension_numbers<[0], [0], [1], [1], [0, 1, 1, 1], [], []>} : vector<32x64xbf16>, vector<32x64xbf16>, vector<64x64xf32> -> vector<64x64xf32>
    %cst_27 = arith.constant dense<0xFF800000> : vector<64xf32>
    %76 = vector.multi_reduction <maximumf>, %75, %cst_27 [1] : vector<64x64xf32> to vector<64xf32>
    %77 = vector.shape_cast %76 : vector<64xf32> to vector<64x1xf32>
    %78 = vector.broadcast %77 : vector<64x1xf32> to vector<64x64xf32>
    %79 = arith.subf %75, %78 : vector<64x64xf32>
    %80 = math.exp %79 : vector<64x64xf32>
    %cst_28 = arith.constant dense<0.000000e+00> : vector<64xf32>
    %81 = vector.multi_reduction <add>, %80, %cst_28 [1] : vector<64x64xf32> to vector<64xf32>
    %82 = vector.shape_cast %81 : vector<64xf32> to vector<64x1xf32>
    %83 = tpu.reciprocal %82 {approx = true} : vector<64x1xf32> -> vector<64x1xf32>
    %84 = vector.broadcast %83 : vector<64x1xf32> to vector<64x64xf32>
    %85 = arith.mulf %80, %84 : vector<64x64xf32>
    %86 = arith.truncf %85 : vector<64x64xf32> to vector<64x64xbf16>
    %cst_29 = arith.constant dense<0.000000e+00> : vector<32x64xf32>
    %87 = tpu.matmul %74, %86, %cst_29 {dimension_numbers = #tpu.dot_dimension_numbers<[1], [1], [0], [0], [0, 0, 1, 0], [], []>} : vector<32x64xbf16>, vector<64x64xbf16>, vector<32x64xf32> -> vector<32x64xf32>
    %c2 = arith.constant 2 : index
    %c0_30 = arith.constant 0 : index
    %c0_31 = arith.constant 0 : index
    %88 = vector.load %arg4[%c2, %c0_30, %c0_31] : memref<4x32x32xbf16, #tpu.memory_space<vmem>>, vector<1x32x32xbf16>
    %89 = vector.shape_cast %88 : vector<1x32x32xbf16> to vector<32x32xbf16>
    %90 = arith.truncf %87 : vector<32x64xf32> to vector<32x64xbf16>
    %cst_32 = arith.constant dense<0.000000e+00> : vector<32x64xf32>
    %91 = tpu.matmul %89, %90, %cst_32 {dimension_numbers = #tpu.dot_dimension_numbers<[1], [0], [0], [1], [0, 0, 1, 1], [], []>} : vector<32x32xbf16>, vector<32x64xbf16>, vector<32x64xf32> -> vector<32x64xf32>
    %92 = arith.addf %68, %91 : vector<32x64xf32>
    %93 = vector.extract_strided_slice %17 {offsets = [96, 0], sizes = [32, 64], strides = [1, 1]} : vector<384x64xf32> to vector<32x64xf32>
    %94 = arith.truncf %93 : vector<32x64xf32> to vector<32x64xbf16>
    %95 = vector.extract_strided_slice %17 {offsets = [224, 0], sizes = [32, 64], strides = [1, 1]} : vector<384x64xf32> to vector<32x64xf32>
    %96 = arith.truncf %95 : vector<32x64xf32> to vector<32x64xbf16>
    %97 = vector.extract_strided_slice %17 {offsets = [352, 0], sizes = [32, 64], strides = [1, 1]} : vector<384x64xf32> to vector<32x64xf32>
    %98 = arith.truncf %97 : vector<32x64xf32> to vector<32x64xbf16>
    %cst_33 = arith.constant dense<0.000000e+00> : vector<64x64xf32>
    %99 = tpu.matmul %94, %96, %cst_33 {dimension_numbers = #tpu.dot_dimension_numbers<[0], [0], [1], [1], [0, 1, 1, 1], [], []>} : vector<32x64xbf16>, vector<32x64xbf16>, vector<64x64xf32> -> vector<64x64xf32>
    %cst_34 = arith.constant dense<0xFF800000> : vector<64xf32>
    %100 = vector.multi_reduction <maximumf>, %99, %cst_34 [1] : vector<64x64xf32> to vector<64xf32>
    %101 = vector.shape_cast %100 : vector<64xf32> to vector<64x1xf32>
    %102 = vector.broadcast %101 : vector<64x1xf32> to vector<64x64xf32>
    %103 = arith.subf %99, %102 : vector<64x64xf32>
    %104 = math.exp %103 : vector<64x64xf32>
    %cst_35 = arith.constant dense<0.000000e+00> : vector<64xf32>
    %105 = vector.multi_reduction <add>, %104, %cst_35 [1] : vector<64x64xf32> to vector<64xf32>
    %106 = vector.shape_cast %105 : vector<64xf32> to vector<64x1xf32>
    %107 = tpu.reciprocal %106 {approx = true} : vector<64x1xf32> -> vector<64x1xf32>
    %108 = vector.broadcast %107 : vector<64x1xf32> to vector<64x64xf32>
    %109 = arith.mulf %104, %108 : vector<64x64xf32>
    %110 = arith.truncf %109 : vector<64x64xf32> to vector<64x64xbf16>
    %cst_36 = arith.constant dense<0.000000e+00> : vector<32x64xf32>
    %111 = tpu.matmul %98, %110, %cst_36 {dimension_numbers = #tpu.dot_dimension_numbers<[1], [1], [0], [0], [0, 0, 1, 0], [], []>} : vector<32x64xbf16>, vector<64x64xbf16>, vector<32x64xf32> -> vector<32x64xf32>
    %c3 = arith.constant 3 : index
    %c0_37 = arith.constant 0 : index
    %c0_38 = arith.constant 0 : index
    %112 = vector.load %arg4[%c3, %c0_37, %c0_38] : memref<4x32x32xbf16, #tpu.memory_space<vmem>>, vector<1x32x32xbf16>
    %113 = vector.shape_cast %112 : vector<1x32x32xbf16> to vector<32x32xbf16>
    %114 = arith.truncf %111 : vector<32x64xf32> to vector<32x64xbf16>
    %cst_39 = arith.constant dense<0.000000e+00> : vector<32x64xf32>
    %115 = tpu.matmul %113, %114, %cst_39 {dimension_numbers = #tpu.dot_dimension_numbers<[1], [0], [0], [1], [0, 0, 1, 1], [], []>} : vector<32x32xbf16>, vector<32x64xbf16>, vector<32x64xf32> -> vector<32x64xf32>
    %116 = arith.addf %92, %115 : vector<32x64xf32>
    %c0_40 = arith.constant 0 : index
    %c0_41 = arith.constant 0 : index
    %c0_42 = arith.constant 0 : index
    %117 = vector.load %arg6[%c0_40, %c0_41, %c0_42] : memref<1x32x64xf32, #tpu.memory_space<vmem>>, vector<1x32x64xf32>
    %118 = vector.shape_cast %117 : vector<1x32x64xf32> to vector<32x64xf32>
    %119 = vector.shape_cast %116 : vector<32x64xf32> to vector<1x32x64xf32>
    tpu.vector_store %arg6[%c0_40, %c0_41, %c0_42], %119 {strides = array<i32>} : memref<1x32x64xf32, #tpu.memory_space<vmem>>, vector<1x32x64xf32>,
    return
  }
  func.func @transform_0(%arg0: i32) -> (i32, i32, i32) {
    %c0_i32 = arith.constant 0 : i32
    %c0_i32_0 = arith.constant 0 : i32
    %c0_i32_1 = arith.constant 0 : i32
    return %arg0, %c0_i32, %c0_i32_0 : i32, i32, i32
  }
  func.func @transform_1(%arg0: i32) -> (i32, i32) {
    %c0_i32 = arith.constant 0 : i32
    %c0_i32_0 = arith.constant 0 : i32
    %c0_i32_1 = arith.constant 0 : i32
    return %c0_i32, %c0_i32_0 : i32, i32
  }
  func.func @transform_2(%arg0: i32) -> (i32, i32) {
    %c0_i32 = arith.constant 0 : i32
    %c0_i32_0 = arith.constant 0 : i32
    %c0_i32_1 = arith.constant 0 : i32
    return %c0_i32, %c0_i32_0 : i32, i32
  }
  func.func @transform_3(%arg0: i32) -> (i32, i32, i32) {
    %c0_i32 = arith.constant 0 : i32
    %c0_i32_0 = arith.constant 0 : i32
    %c0_i32_1 = arith.constant 0 : i32
    %c0_i32_2 = arith.constant 0 : i32
    return %c0_i32, %c0_i32_0, %c0_i32_1 : i32, i32, i32
  }
  func.func @transform_4(%arg0: i32) -> (i32, i32) {
    %c0_i32 = arith.constant 0 : i32
    %c0_i32_0 = arith.constant 0 : i32
    %c0_i32_1 = arith.constant 0 : i32
    return %c0_i32, %c0_i32_0 : i32, i32
  }
  func.func @transform_5(%arg0: i32) -> (i32, i32, i32) {
    %c0_i32 = arith.constant 0 : i32
    %c0_i32_0 = arith.constant 0 : i32
    %c0_i32_1 = arith.constant 0 : i32
    return %arg0, %c0_i32, %c0_i32_0 : i32, i32, i32
  }
}

</mosaic_0001>

<llo_original>
// kernel: tpu_custom_call.1
$region0: #{tpu_custom_call.1}
  #allocation0 [shape = 'u32[]', space=smem, size = 0x4, offset = 0x4, fixed_abs, tag = 'smem constant byte address 0x4 - core index']
  #allocation1 [shape = 'u32[144,128]{1,0:T(1,128)}', space=vmem, size = 0x12000, scoped, tag = 'internal scratch']
  %s0 = inlined_call_operand.vmem [shape: f32[2,32,64], index: 0, kind: input, shape index: {}]
  %s1 = inlined_call_operand.vmem [shape: f32[32,1], index: 1, kind: input, shape index: {}]
  %s2 = inlined_call_operand.vmem [shape: bf16[384,32], index: 2, kind: input, shape index: {}]
  %s3 = inlined_call_operand.vmem [shape: bf16[4,32,32], index: 3, kind: input, shape index: {}]
  %s4 = inlined_call_operand.vmem [shape: f32[32,1], index: 4, kind: input, shape index: {}]
  %s5 = inlined_call_operand.hbm [shape: f32[2,32,64], index: 5, kind: output, shape index: {}]
  %s6 = sld [smem:[#allocation0]]
  $region53: #{tpu_custom_call.1} parent=0
    _
  %s8 = ssub.s32 1, %s6
  %s9 = scalar_select 0, %s8, %s6
  $region1: #{tpu_custom_call.1} parent=0
    #allocation2 [shape = 'u8[32768]{0}', space=vmem, size = 0x8000, scoped, tag = 'output window, operand 0']
    #allocation3 [shape = 's32[2]{0}', space=sflag, size = 0x8, scoped, tag = 'scoped memory for tpu_custom_call.1']
    %10 = vsyncpa [#allocation3], 0
    %s11 = scalar_lea.sflag [#allocation3], 1
    %12 = vsyncpa %s11, 0
    loop: start=0, step=1, limit=4
    $region2: #{tpu_custom_call.1} parent=1 // loop_pre_header
      _
    $region3: #{tpu_custom_call.1} parent=1 // loop_header
      %s14 = sphi 0, %s18
      %p15 = scmp.ge.s32.totalorder %s14, 4
      %s24 = sphi 0, %s26
      %s27 = sphi 0, %s24
      %s28 = sphi 0, %s27
      %s44 = sphi 0, %s28
      %s48 = sphi 0, %s48
      %s50 = sphi 0, %s48
      %s51 = sphi 0, %s50
      %s65 = sphi 0, %s51
      %s69 = sphi 0, %s69
      %s71 = sphi 0, %s69
      %s72 = sphi 0, %s71
      %s86 = sphi 0, %s72
      %s90 = sphi 0, %s90
      %s92 = sphi 0, %s90
      %s93 = sphi 0, %s92
      %s107 = sphi 0, %s93
      %s111 = sphi 0, %s111
      %s113 = sphi 0, %s111
      %s114 = sphi 0, %s113
      %s128 = sphi 0, %s114
      %s134 = sphi 0, %s136
      %s137 = sphi 0, %s134
      %s138 = sphi 0, %s137
      %s154 = sphi 0, %s138
    $region4: #{tpu_custom_call.1} parent=1 // loop_header_branch
      %17 = sbr.rel (%p15) target = $region8
    $region5: #{tpu_custom_call.1} parent=1 // loop_body
      %s19 = ssub.s32 %s14, 1
      %s20 = ssub.s32 %s14, 2
      %s21 = sadd.s32 %s14, 1
      %s22 = ssub.s32 %s14, %s21
      %p23 = scmp.eq.s32.totalorder %s22, 0
      %s25 = sadd.s32 %s24, 1
      %s26 = scalar_select %p23, %s24, %s25
      %p29 = pneg %p23
      %p30 = scmp.eq.s32.totalorder %s14, 1
      %p31 = por %p29, %p30
      %p32 = scmp.ne.s32.totalorder %s24, %s27
      %p33 = scmp.eq.s32.totalorder %s14, 0
      %p34 = por %p32, %p33
      %p35 = scmp.ne.s32.totalorder %s24, %s27
      %p36 = scmp.eq.s32.totalorder %s19, 1
      %p37 = por %p35, %p36
      %p38 = scmp.ne.s32.totalorder %s27, %s28
      %p39 = scmp.eq.s32.totalorder %s19, 0
      %p40 = por %p38, %p39
      %p41 = scmp.ne.s32.totalorder %s27, %s28
      %p42 = scmp.eq.s32.totalorder %s20, 1
      %p43 = por %p41, %p42
      %p45 = scmp.ne.s32.totalorder %s28, %s44
      %p46 = scmp.eq.s32.totalorder %s20, 0
      %p47 = por %p45, %p46
      %s49 = sadd.s32 %s48, 1
      %p52 = scmp.eq.s32.totalorder %s14, 1
      %p53 = scmp.ne.s32.totalorder %s48, %s50
      %p54 = scmp.eq.s32.totalorder %s14, 0
      %p55 = por %p53, %p54
      %p56 = scmp.ne.s32.totalorder %s48, %s50
      %p57 = scmp.eq.s32.totalorder %s19, 1
      %p58 = por %p56, %p57
      %p59 = scmp.ne.s32.totalorder %s50, %s51
      %p60 = scmp.eq.s32.totalorder %s19, 0
      %p61 = por %p59, %p60
      %p62 = scmp.ne.s32.totalorder %s50, %s51
      %p63 = scmp.eq.s32.totalorder %s20, 1
      %p64 = por %p62, %p63
      %p66 = scmp.ne.s32.totalorder %s51, %s65
      %p67 = scmp.eq.s32.totalorder %s20, 0
      %p68 = por %p66, %p67
      %s70 = sadd.s32 %s69, 1
      %p73 = scmp.eq.s32.totalorder %s14, 1
      %p74 = scmp.ne.s32.totalorder %s69, %s71
      %p75 = scmp.eq.s32.totalorder %s14, 0
      %p76 = por %p74, %p75
      %p77 = scmp.ne.s32.totalorder %s69, %s71
      %p78 = scmp.eq.s32.totalorder %s19, 1
      %p79 = por %p77, %p78
      %p80 = scmp.ne.s32.totalorder %s71, %s72
      %p81 = scmp.eq.s32.totalorder %s19, 0
      %p82 = por %p80, %p81
      %p83 = scmp.ne.s32.totalorder %s71, %s72
      %p84 = scmp.eq.s32.totalorder %s20, 1
      %p85 = por %p83, %p84
      %p87 = scmp.ne.s32.totalorder %s72, %s86
      %p88 = scmp.eq.s32.totalorder %s20, 0
      %p89 = por %p87, %p88
      %s91 = sadd.s32 %s90, 1
      %p94 = scmp.eq.s32.totalorder %s14, 1
      %p95 = scmp.ne.s32.totalorder %s90, %s92
      %p96 = scmp.eq.s32.totalorder %s14, 0
      %p97 = por %p95, %p96
      %p98 = scmp.ne.s32.totalorder %s90, %s92
      %p99 = scmp.eq.s32.totalorder %s19, 1
      %p100 = por %p98, %p99
      %p101 = scmp.ne.s32.totalorder %s92, %s93
      %p102 = scmp.eq.s32.totalorder %s19, 0
      %p103 = por %p101, %p102
      %p104 = scmp.ne.s32.totalorder %s92, %s93
      %p105 = scmp.eq.s32.totalorder %s20, 1
      %p106 = por %p104, %p105
      %p108 = scmp.ne.s32.totalorder %s93, %s107
      %p109 = scmp.eq.s32.totalorder %s20, 0
      %p110 = por %p108, %p109
      %s112 = sadd.s32 %s111, 1
      %p115 = scmp.eq.s32.totalorder %s14, 1
      %p116 = scmp.ne.s32.totalorder %s111, %s113
      %p117 = scmp.eq.s32.totalorder %s14, 0
      %p118 = por %p116, %p117
      %p119 = scmp.ne.s32.totalorder %s111, %s113
      %p120 = scmp.eq.s32.totalorder %s19, 1
      %p121 = por %p119, %p120
      %p122 = scmp.ne.s32.totalorder %s113, %s114
      %p123 = scmp.eq.s32.totalorder %s19, 0
      %p124 = por %p122, %p123
      %p125 = scmp.ne.s32.totalorder %s113, %s114
      %p126 = scmp.eq.s32.totalorder %s20, 1
      %p127 = por %p125, %p126
      %p129 = scmp.ne.s32.totalorder %s114, %s128
      %p130 = scmp.eq.s32.totalorder %s20, 0
      %p131 = por %p129, %p130
      %s132 = ssub.s32 %s14, %s21
      %p133 = scmp.eq.s32.totalorder %s132, 0
      %s135 = sadd.s32 %s134, 1
      %s136 = scalar_select %p133, %s134, %s135
      %p139 = pneg %p133
      %p140 = scmp.eq.s32.totalorder %s14, 1
      %p141 = por %p139, %p140
      %p142 = scmp.ne.s32.totalorder %s134, %s137
      %p143 = scmp.eq.s32.totalorder %s14, 0
      %p144 = por %p142, %p143
      %p145 = scmp.ne.s32.totalorder %s134, %s137
      %p146 = scmp.eq.s32.totalorder %s19, 1
      %p147 = por %p145, %p146
      %p148 = scmp.ne.s32.totalorder %s137, %s138
      %p149 = scmp.eq.s32.totalorder %s19, 0
      %p150 = por %p148, %p149
      %p151 = scmp.ne.s32.totalorder %s137, %s138
      %p152 = scmp.eq.s32.totalorder %s20, 1
      %p153 = por %p151, %p152
      %p155 = scmp.ne.s32.totalorder %s138, %s154
      %p156 = scmp.eq.s32.totalorder %s20, 0
      %p157 = por %p155, %p156
      %p158 = scmp.le.s32.totalorder 1, %s14
      %p159 = scmp.lt.s32.totalorder %s14, 3
      %p160 = pnand %p158, %p159
      %p161 = pneg %p160
      // Predicated region
      $region9: #{tpu_custom_call.1} parent=5 // pred_check
        _
      $region10: #{tpu_custom_call.1} parent=5 // pred_check_branch
        %163 = sbr.rel (%p160) target = $region12
      $region11: #{tpu_custom_call.1} parent=5 // pred_region
        %s164 = ssub.s32 %s14, 1
        // Predicated region
        $region13: #{tpu_custom_call.1} parent=11 // pred_check
          %p165 = pneg %p61
        $region14: #{tpu_custom_call.1} parent=11 // pred_check_branch
          %167 = sbr.rel (%p165) target = $region16
        $region15: #{tpu_custom_call.1} parent=11 // pred_region
          _
        $region16: #{tpu_custom_call.1} parent=11 // pred_fallthru
          _
        // Predicated region
        $region17: #{tpu_custom_call.1} parent=11 // pred_check
          %p168 = pneg %p82
        $region18: #{tpu_custom_call.1} parent=11 // pred_check_branch
          %170 = sbr.rel (%p168) target = $region20
        $region19: #{tpu_custom_call.1} parent=11 // pred_region
          _
        $region20: #{tpu_custom_call.1} parent=11 // pred_fallthru
          _
        // Predicated region
        $region21: #{tpu_custom_call.1} parent=11 // pred_check
          %p171 = pneg %p103
        $region22: #{tpu_custom_call.1} parent=11 // pred_check_branch
          %173 = sbr.rel (%p171) target = $region24
        $region23: #{tpu_custom_call.1} parent=11 // pred_region
          _
        $region24: #{tpu_custom_call.1} parent=11 // pred_fallthru
          _
        // Predicated region
        $region25: #{tpu_custom_call.1} parent=11 // pred_check
          %p174 = pneg %p124
        $region26: #{tpu_custom_call.1} parent=11 // pred_check_branch
          %176 = sbr.rel (%p174) target = $region28
        $region27: #{tpu_custom_call.1} parent=11 // pred_region
          _
        $region28: #{tpu_custom_call.1} parent=11 // pred_fallthru
          _
      $region12: #{tpu_custom_call.1} parent=5 // pred_fallthru
        _
      %p177 = scmp.lt.s32.totalorder %s14, 2
      // Predicated region
      $region29: #{tpu_custom_call.1} parent=5 // pred_check
        %p178 = pneg %p177
      $region30: #{tpu_custom_call.1} parent=5 // pred_check_branch
        %180 = sbr.rel (%p178) target = $region32
      $region31: #{tpu_custom_call.1} parent=5 // pred_region
        // Predicated region
        $region33: #{tpu_custom_call.1} parent=31 // pred_check
          %p181 = pneg %p34
        $region34: #{tpu_custom_call.1} parent=31 // pred_check_branch
          %183 = sbr.rel (%p181) target = $region36
        $region35: #{tpu_custom_call.1} parent=31 // pred_region
          %p184 = scmp.lt.s32.totalorder %s14, 1
          %s185 = scalar_select %p184, %s14, 1
          %s186 = smul.addr %s185, 4
          %s187 = smul.addr %s186, 8
          %s188 = scalar_lea.vmem %s0, %s187
        $region36: #{tpu_custom_call.1} parent=31 // pred_fallthru
          _
      $region32: #{tpu_custom_call.1} parent=5 // pred_fallthru
        _
      %p189 = scmp.le.s32.totalorder 1, %s14
      %p190 = scmp.lt.s32.totalorder %s14, 3
      %p191 = pnand %p189, %p190
      %p192 = pneg %p191
      // Predicated region
      $region37: #{tpu_custom_call.1} parent=5 // pred_check
        _
      $region38: #{tpu_custom_call.1} parent=5 // pred_check_branch
        %194 = sbr.rel (%p191) target = $region40
      $region39: #{tpu_custom_call.1} parent=5 // pred_region
        %s195 = ssub.s32 %s14, 1
        %p196 = scmp.lt.s32.totalorder %s19, 1
        %s197 = scalar_select %p196, %s19, 1
        %s198 = smul.addr %s197, 4
        %s199 = smul.addr %s198, 8
        %s200 = scalar_lea.vmem %s0, %s199
        %p201 = pneg %p40
        %p202 = pneg %p37
        %p203 = pneg %p61
        %p204 = pneg %p58
        %p205 = pneg %p82
        %p206 = pneg %p79
        %p207 = pneg %p103
        %p208 = pneg %p100
        %p209 = pneg %p124
        %p210 = pneg %p121
        %p211 = pneg %p150
        %p212 = pneg %p147
        %s213 = sand.u32 %s137, 1
        %s214 = scalar_lea.sflag [#allocation3], %s213
        %s215 = sand.u32 %s137, 1
        %s216 = smul.addr %s215, 32
        %s217 = scalar_lea.vmem [#allocation2], %s216
        %p218 = scmp.lt.s32.totalorder %s19, 1
        %s219 = scalar_select %p218, %s19, 1
        %s220 = smul.addr %s219, 4
        %s221 = smul.addr %s220, 8
        %s222 = scalar_lea.vmem %s0, %s221
        %v224 = vld [vmem:[%s222] sm:$0xff]
        %v225 = vld [vmem:[%s222 + $0x8] sm:$0xff]
        %v226 = vld [vmem:[%s222 + $0x10] sm:$0xff]
        %v227 = vld [vmem:[%s222 + $0x18] sm:$0xff]
        %v228 = vmul.f32 %v224, %v224
        %v229 = vmul.f32 %v225, %v225
        %v230 = vmul.f32 %v226, %v226
        %v231 = vmul.f32 %v227, %v227
        %vm232 = vcmask 523264
        %v233 = vsel %vm232, %v228, 0.0
        %v234 = vsel %vm232, %v229, 0.0
        %v235 = vadd.f32 %v233, %v234
        %v236 = vsel %vm232, %v230, 0.0
        %v237 = vadd.f32 %v235, %v236
        %v238 = vsel %vm232, %v231, 0.0
        %v239 = vadd.f32 %v237, %v238
        %v240 = vrot.slane %v239, 4
        %v241 = vadd.f32 %v239, %v240
        %v242 = vrot.slane %v241, 2
        %v243 = vadd.f32 %v241, %v242
        %v244 = vrot.slane %v243, 1
        %v245 = vadd.f32 %v243, %v244
        %v246 = vmax.f32 %v245, 1e-24
        %v247 = vrsqrt.pop %v246
        %v248 = vmul.f32 %v224, %v247
        %v249 = vmul.f32 %v225, %v247
        %v250 = vmul.f32 %v226, %v247
        %v251 = vmul.f32 %v227, %v247
        %v252 = vld [vmem:[%s1] sm:$0xff]
        %v253 = vld [vmem:[%s1 + $0x8] sm:$0xff]
        %v254 = vld [vmem:[%s1 + $0x10] sm:$0xff]
        %v255 = vld [vmem:[%s1 + $0x18] sm:$0xff]
        %v256 = vmul.f32 %v252, 5.656854
        %v257 = vmul.f32 %v253, 5.656854
        %v258 = vmul.f32 %v254, 5.656854
        %v259 = vmul.f32 %v255, 5.656854
        %261 = vset.pattern.permute.xlu0 0
        %262 = vperm.xlu0 %261, %v256
        %v263 = vpop.permute.xlu0 %262
        %266 = vset.pattern.permute.xlu0 0
        %267 = vperm.xlu0 %266, %v257
        %v268 = vpop.permute.xlu0 %267
        %271 = vset.pattern.permute.xlu0 0
        %272 = vperm.xlu0 %271, %v258
        %v273 = vpop.permute.xlu0 %272
        %276 = vset.pattern.permute.xlu0 0
        %277 = vperm.xlu0 %276, %v259
        %v278 = vpop.permute.xlu0 %277
        %v280 = vmul.f32 %v248, %v263
        %v281 = vmul.f32 %v249, %v268
        %v282 = vmul.f32 %v250, %v273
        %v283 = vmul.f32 %v251, %v278
        %v284 = vpack.c.bf16 %v281, %v280
        %v285 = vpack.c.bf16 %v283, %v282
        %v286 = vld [vmem:[%s2] sm:$0xf]
        %v287 = vld [vmem:[%s2 + $0x4] sm:$0xf]
        %v288 = vld [vmem:[%s2 + $0x8] sm:$0xf]
        %v289 = vld [vmem:[%s2 + $0xc] sm:$0xf]
        %v290 = vld [vmem:[%s2 + $0x10] sm:$0xf]
        %v291 = vld [vmem:[%s2 + $0x14] sm:$0xf]
        %v292 = vld [vmem:[%s2 + $0x18] sm:$0xf]
        %v293 = vld [vmem:[%s2 + $0x1c] sm:$0xf]
        %v294 = vld [vmem:[%s2 + $0x20] sm:$0xf]
        %v295 = vld [vmem:[%s2 + $0x24] sm:$0xf]
        %v296 = vld [vmem:[%s2 + $0x28] sm:$0xf]
        %v297 = vld [vmem:[%s2 + $0x2c] sm:$0xf]
        %v298 = vld [vmem:[%s2 + $0x30] sm:$0xf]
        %v299 = vld [vmem:[%s2 + $0x34] sm:$0xf]
        %v300 = vld [vmem:[%s2 + $0x38] sm:$0xf]
        %v301 = vld [vmem:[%s2 + $0x3c] sm:$0xf]
        %v302 = vld [vmem:[%s2 + $0x40] sm:$0xf]
        %v303 = vld [vmem:[%s2 + $0x44] sm:$0xf]
        %v304 = vld [vmem:[%s2 + $0x48] sm:$0xf]
        %v305 = vld [vmem:[%s2 + $0x4c] sm:$0xf]
        %v306 = vld [vmem:[%s2 + $0x50] sm:$0xf]
        %v307 = vld [vmem:[%s2 + $0x54] sm:$0xf]
        %v308 = vld [vmem:[%s2 + $0x58] sm:$0xf]
        %v309 = vld [vmem:[%s2 + $0x5c] sm:$0xf]
        %v310 = vld [vmem:[%s2 + $0x60] sm:$0xf]
        %v311 = vld [vmem:[%s2 + $0x64] sm:$0xf]
        %v312 = vld [vmem:[%s2 + $0x68] sm:$0xf]
        %v313 = vld [vmem:[%s2 + $0x6c] sm:$0xf]
        %v314 = vld [vmem:[%s2 + $0x70] sm:$0xf]
        %v315 = vld [vmem:[%s2 + $0x74] sm:$0xf]
        %v316 = vld [vmem:[%s2 + $0x78] sm:$0xf]
        %v317 = vld [vmem:[%s2 + $0x7c] sm:$0xf]
        %v318 = vld [vmem:[%s2 + $0x80] sm:$0xf]
        %v319 = vld [vmem:[%s2 + $0x84] sm:$0xf]
        %v320 = vld [vmem:[%s2 + $0x88] sm:$0xf]
        %v321 = vld [vmem:[%s2 + $0x8c] sm:$0xf]
        %v322 = vld [vmem:[%s2 + $0x90] sm:$0xf]
        %v323 = vld [vmem:[%s2 + $0x94] sm:$0xf]
        %v324 = vld [vmem:[%s2 + $0x98] sm:$0xf]
        %v325 = vld [vmem:[%s2 + $0x9c] sm:$0xf]
        %v326 = vld [vmem:[%s2 + $0xa0] sm:$0xf]
        %v327 = vld [vmem:[%s2 + $0xa4] sm:$0xf]
        %v328 = vld [vmem:[%s2 + $0xa8] sm:$0xf]
        %v329 = vld [vmem:[%s2 + $0xac] sm:$0xf]
        %v330 = vld [vmem:[%s2 + $0xb0] sm:$0xf]
        %v331 = vld [vmem:[%s2 + $0xb4] sm:$0xf]
        %v332 = vld [vmem:[%s2 + $0xb8] sm:$0xf]
        %v333 = vld [vmem:[%s2 + $0xbc] sm:$0xf]
        %v382 = vunpack.c.l.b16 %v286
        %v383 = vunpack.c.l.b16 %v287
        %v384 = vunpack.c.l.b16 %v288
        %v385 = vunpack.c.l.b16 %v289
        %v386 = vunpack.c.l.b16 %v290
        %v387 = vunpack.c.l.b16 %v291
        %v388 = vunpack.c.l.b16 %v292
        %v389 = vunpack.c.l.b16 %v293
        %v390 = vunpack.c.l.b16 %v294
        %v391 = vunpack.c.l.b16 %v295
        %v392 = vunpack.c.l.b16 %v296
        %v393 = vunpack.c.l.b16 %v297
        %v394 = vunpack.c.l.b16 %v298
        %v395 = vunpack.c.l.b16 %v299
        %v396 = vunpack.c.l.b16 %v300
        %v397 = vunpack.c.l.b16 %v301
        %v398 = vunpack.c.l.b16 %v302
        %v399 = vunpack.c.l.b16 %v303
        %v400 = vunpack.c.l.b16 %v304
        %v401 = vunpack.c.l.b16 %v305
        %v402 = vunpack.c.l.b16 %v306
        %v403 = vunpack.c.l.b16 %v307
        %v404 = vunpack.c.l.b16 %v308
        %v405 = vunpack.c.l.b16 %v309
        %v406 = vunpack.c.l.b16 %v310
        %v407 = vunpack.c.l.b16 %v311
        %v408 = vunpack.c.l.b16 %v312
        %v409 = vunpack.c.l.b16 %v313
        %v410 = vunpack.c.l.b16 %v314
        %v411 = vunpack.c.l.b16 %v315
        %v412 = vunpack.c.l.b16 %v316
        %v413 = vunpack.c.l.b16 %v317
        %v414 = vunpack.c.l.b16 %v318
        %v415 = vunpack.c.l.b16 %v319
        %v416 = vunpack.c.l.b16 %v320
        %v417 = vunpack.c.l.b16 %v321
        %v418 = vunpack.c.l.b16 %v322
        %v419 = vunpack.c.l.b16 %v323
        %v420 = vunpack.c.l.b16 %v324
        %v421 = vunpack.c.l.b16 %v325
        %v422 = vunpack.c.l.b16 %v326
        %v423 = vunpack.c.l.b16 %v327
        %v424 = vunpack.c.l.b16 %v328
        %v425 = vunpack.c.l.b16 %v329
        %v426 = vunpack.c.l.b16 %v330
        %v427 = vunpack.c.l.b16 %v331
        %v428 = vunpack.c.l.b16 %v332
        %v429 = vunpack.c.l.b16 %v333
        %v430 = vpack.c.b16 %v383, %v382
        %v431 = vpack.c.b16 %v385, %v384
        %v432 = vpack.c.b16 %v387, %v386
        %v433 = vpack.c.b16 %v389, %v388
        %v434 = vpack.c.b16 %v391, %v390
        %v435 = vpack.c.b16 %v393, %v392
        %v436 = vpack.c.b16 %v395, %v394
        %v437 = vpack.c.b16 %v397, %v396
        %v438 = vpack.c.b16 %v399, %v398
        %v439 = vpack.c.b16 %v401, %v400
        %v440 = vpack.c.b16 %v403, %v402
        %v441 = vpack.c.b16 %v405, %v404
        %v442 = vpack.c.b16 %v407, %v406
        %v443 = vpack.c.b16 %v409, %v408
        %v444 = vpack.c.b16 %v411, %v410
        %v445 = vpack.c.b16 %v413, %v412
        %v446 = vpack.c.b16 %v415, %v414
        %v447 = vpack.c.b16 %v417, %v416
        %v448 = vpack.c.b16 %v419, %v418
        %v449 = vpack.c.b16 %v421, %v420
        %v450 = vpack.c.b16 %v423, %v422
        %v451 = vpack.c.b16 %v425, %v424
        %v452 = vpack.c.b16 %v427, %v426
        %v453 = vpack.c.b16 %v429, %v428
        %vm454 = vcmask 261120
        %v456 = vsel %vm454, %v430, 0
        %v459 = vsel %vm454, %v431, 0
        %v462 = vsel %vm454, %v432, 0
        %v465 = vsel %vm454, %v433, 0
        %v468 = vsel %vm454, %v434, 0
        %v471 = vsel %vm454, %v435, 0
        %v474 = vsel %vm454, %v436, 0
        %v477 = vsel %vm454, %v437, 0
        %v480 = vsel %vm454, %v438, 0
        %v483 = vsel %vm454, %v439, 0
        %v486 = vsel %vm454, %v440, 0
        %v489 = vsel %vm454, %v441, 0
        %v492 = vsel %vm454, %v442, 0
        %v495 = vsel %vm454, %v443, 0
        %v498 = vsel %vm454, %v444, 0
        %v501 = vsel %vm454, %v445, 0
        %v504 = vsel %vm454, %v446, 0
        %v507 = vsel %vm454, %v447, 0
        %v510 = vsel %vm454, %v448, 0
        %v513 = vsel %vm454, %v449, 0
        %v516 = vsel %vm454, %v450, 0
        %v519 = vsel %vm454, %v451, 0
        %v522 = vsel %vm454, %v452, 0
        %v525 = vsel %vm454, %v453, 0
        %527 = vmatprep.subr.bf16.mxu0 0
        %528 = vmatpush1.bf16.msra.mxu0 %v284
        %529 = vmatprep.subr.bf16.mxu0 0
        %530 = vmatpush1.bf16.msra.mxu0 %v285
        %531 = vmatprep.subr.bf16.mxu0 0
        %532 = vmatpush1.bf16.msra.mxu0 0
        %533 = vmatprep.subr.bf16.mxu0 0
        %534 = vmatpush1.bf16.msra.mxu0 0
        %535 = vmatprep.subr.bf16.mxu0 0
        %536 = vmatpush1.bf16.msra.mxu0 0
        %537 = vmatprep.subr.bf16.mxu0 0
        %538 = vmatpush1.bf16.msra.mxu0 0
        %539 = vmatprep.subr.bf16.mxu0 0
        %540 = vmatpush1.bf16.msra.mxu0 0
        %541 = vmatprep.subr.bf16.mxu0 0
        %542 = vmatpush1.bf16.msra.mxu0 0
        %543 = vmatprep.subr.bf16.mxu0 0
        %544 = vmatpush1.bf16.msra.mxu0 0
        %545 = vmatprep.subr.bf16.mxu0 0
        %546 = vmatpush1.bf16.msra.mxu0 0
        %547 = vmatprep.subr.bf16.mxu0 0
        %548 = vmatpush1.bf16.msra.mxu0 0
        %549 = vmatprep.subr.bf16.mxu0 0
        %550 = vmatpush1.bf16.msra.mxu0 0
        %551 = vmatprep.subr.bf16.mxu0 0
        %552 = vmatpush1.bf16.msra.mxu0 0
        %553 = vmatprep.subr.bf16.mxu0 0
        %554 = vmatpush1.bf16.msra.mxu0 0
        %555 = vmatprep.subr.bf16.mxu0 0
        %556 = vmatpush1.bf16.msra.mxu0 0
        %557 = vmatprep.subr.bf16.mxu0 0
        %558 = vmatpush1.bf16.msra.mxu0 0
        %559 = vmatprep.mubr.bf16.mxu0 0
        %560 = vmatmul.mubr.bf16.gmra.mrb[0].mxu0 %v456
        %v561 = vpop.f32.mrb[0].mxu0
        %v562 = vadd.f32 0.0, %v561
        %v563 = vpop.f32.mrb[0].mxu0
        %v564 = vpop.f32.mrb[0].mxu0
        %v565 = vadd.f32 0.0, %v564
        %v566 = vpop.f32.mrb[0].mxu0
        %567 = vmatprep.mubr.bf16.mxu0 0
        %568 = vmatmul.mubr.bf16.gmra.mrb[0].mxu0 %v459
        %v569 = vpop.f32.mrb[0].mxu0
        %v570 = vadd.f32 0.0, %v569
        %v571 = vpop.f32.mrb[0].mxu0
        %v572 = vpop.f32.mrb[0].mxu0
        %v573 = vadd.f32 0.0, %v572
        %v574 = vpop.f32.mrb[0].mxu0
        %575 = vmatprep.mubr.bf16.mxu0 0
        %576 = vmatmul.mubr.bf16.gmra.mrb[0].mxu0 %v462
        %v577 = vpop.f32.mrb[0].mxu0
        %v578 = vadd.f32 0.0, %v577
        %v579 = vpop.f32.mrb[0].mxu0
        %v580 = vpop.f32.mrb[0].mxu0
        %v581 = vadd.f32 0.0, %v580
        %v582 = vpop.f32.mrb[0].mxu0
        %583 = vmatprep.mubr.bf16.mxu0 0
        %584 = vmatmul.mubr.bf16.gmra.mrb[0].mxu0 %v465
        %v585 = vpop.f32.mrb[0].mxu0
        %v586 = vadd.f32 0.0, %v585
        %v587 = vpop.f32.mrb[0].mxu0
        %v588 = vpop.f32.mrb[0].mxu0
        %v589 = vadd.f32 0.0, %v588
        %v590 = vpop.f32.mrb[0].mxu0
        %591 = vmatprep.mubr.bf16.mxu0 0
        %592 = vmatmul.mubr.bf16.gmra.mrb[0].mxu0 %v468
        %v593 = vpop.f32.mrb[0].mxu0
        %v594 = vadd.f32 0.0, %v593
        %v595 = vpop.f32.mrb[0].mxu0
        %v596 = vpop.f32.mrb[0].mxu0
        %v597 = vadd.f32 0.0, %v596
        %v598 = vpop.f32.mrb[0].mxu0
        %599 = vmatprep.mubr.bf16.mxu0 0
        %600 = vmatmul.mubr.bf16.gmra.mrb[0].mxu0 %v471
        %v601 = vpop.f32.mrb[0].mxu0
        %v602 = vadd.f32 0.0, %v601
        %v603 = vpop.f32.mrb[0].mxu0
        %v604 = vpop.f32.mrb[0].mxu0
        %v605 = vadd.f32 0.0, %v604
        %v606 = vpop.f32.mrb[0].mxu0
        %607 = vmatprep.mubr.bf16.mxu0 0
        %608 = vmatmul.mubr.bf16.gmra.mrb[0].mxu0 %v474
        %v609 = vpop.f32.mrb[0].mxu0
        %v610 = vadd.f32 0.0, %v609
        %v611 = vpop.f32.mrb[0].mxu0
        %v612 = vpop.f32.mrb[0].mxu0
        %v613 = vadd.f32 0.0, %v612
        %v614 = vpop.f32.mrb[0].mxu0
        %615 = vmatprep.mubr.bf16.mxu0 0
        %616 = vmatmul.mubr.bf16.gmra.mrb[0].mxu0 %v477
        %v617 = vpop.f32.mrb[0].mxu0
        %v618 = vadd.f32 0.0, %v617
        %v619 = vpop.f32.mrb[0].mxu0
        %v620 = vpop.f32.mrb[0].mxu0
        %v621 = vadd.f32 0.0, %v620
        %v622 = vpop.f32.mrb[0].mxu0
        %623 = vmatprep.mubr.bf16.mxu0 0
        %624 = vmatmul.mubr.bf16.gmra.mrb[0].mxu0 %v480
        %v625 = vpop.f32.mrb[0].mxu0
        %v626 = vadd.f32 0.0, %v625
        %v627 = vpop.f32.mrb[0].mxu0
        %v628 = vpop.f32.mrb[0].mxu0
        %v629 = vadd.f32 0.0, %v628
        %v630 = vpop.f32.mrb[0].mxu0
        %631 = vmatprep.mubr.bf16.mxu0 0
        %632 = vmatmul.mubr.bf16.gmra.mrb[0].mxu0 %v483
        %v633 = vpop.f32.mrb[0].mxu0
        %v634 = vadd.f32 0.0, %v633
        %v635 = vpop.f32.mrb[0].mxu0
        %v636 = vpop.f32.mrb[0].mxu0
        %v637 = vadd.f32 0.0, %v636
        %v638 = vpop.f32.mrb[0].mxu0
        %639 = vmatprep.mubr.bf16.mxu0 0
        %640 = vmatmul.mubr.bf16.gmra.mrb[0].mxu0 %v486
        %v641 = vpop.f32.mrb[0].mxu0
        %v642 = vadd.f32 0.0, %v641
        %v643 = vpop.f32.mrb[0].mxu0
        %v644 = vpop.f32.mrb[0].mxu0
        %v645 = vadd.f32 0.0, %v644
        %v646 = vpop.f32.mrb[0].mxu0
        %647 = vmatprep.mubr.bf16.mxu0 0
        %648 = vmatmul.mubr.bf16.gmra.mrb[0].mxu0 %v489
        %v649 = vpop.f32.mrb[0].mxu0
        %v650 = vadd.f32 0.0, %v649
        %v651 = vpop.f32.mrb[0].mxu0
        %v652 = vpop.f32.mrb[0].mxu0
        %v653 = vadd.f32 0.0, %v652
        %v654 = vpop.f32.mrb[0].mxu0
        %655 = vmatprep.mubr.bf16.mxu0 0
        %656 = vmatmul.mubr.bf16.gmra.mrb[0].mxu0 %v492
        %v657 = vpop.f32.mrb[0].mxu0
        %v658 = vadd.f32 0.0, %v657
        %v659 = vpop.f32.mrb[0].mxu0
        %v660 = vpop.f32.mrb[0].mxu0
        %v661 = vadd.f32 0.0, %v660
        %v662 = vpop.f32.mrb[0].mxu0
        %663 = vmatprep.mubr.bf16.mxu0 0
        %664 = vmatmul.mubr.bf16.gmra.mrb[0].mxu0 %v495
        %v665 = vpop.f32.mrb[0].mxu0
        %v666 = vadd.f32 0.0, %v665
        %v667 = vpop.f32.mrb[0].mxu0
        %v668 = vpop.f32.mrb[0].mxu0
        %v669 = vadd.f32 0.0, %v668
        %v670 = vpop.f32.mrb[0].mxu0
        %671 = vmatprep.mubr.bf16.mxu0 0
        %672 = vmatmul.mubr.bf16.gmra.mrb[0].mxu0 %v498
        %v673 = vpop.f32.mrb[0].mxu0
        %v674 = vadd.f32 0.0, %v673
        %v675 = vpop.f32.mrb[0].mxu0
        %v676 = vpop.f32.mrb[0].mxu0
        %v677 = vadd.f32 0.0, %v676
        %v678 = vpop.f32.mrb[0].mxu0
        %679 = vmatprep.mubr.bf16.mxu0 0
        %680 = vmatmul.mubr.bf16.gmra.mrb[0].mxu0 %v501
        %v681 = vpop.f32.mrb[0].mxu0
        %v682 = vadd.f32 0.0, %v681
        %v683 = vpop.f32.mrb[0].mxu0
        %v684 = vpop.f32.mrb[0].mxu0
        %v685 = vadd.f32 0.0, %v684
        %v686 = vpop.f32.mrb[0].mxu0
        %687 = vmatprep.mubr.bf16.mxu0 0
        %688 = vmatmul.mubr.bf16.gmra.mrb[0].mxu0 %v504
        %v689 = vpop.f32.mrb[0].mxu0
        %v690 = vadd.f32 0.0, %v689
        %v691 = vpop.f32.mrb[0].mxu0
        %v692 = vpop.f32.mrb[0].mxu0
        %v693 = vadd.f32 0.0, %v692
        %v694 = vpop.f32.mrb[0].mxu0
        %695 = vmatprep.mubr.bf16.mxu0 0
        %696 = vmatmul.mubr.bf16.gmra.mrb[0].mxu0 %v507
        %v697 = vpop.f32.mrb[0].mxu0
        %v698 = vadd.f32 0.0, %v697
        %v699 = vpop.f32.mrb[0].mxu0
        %v700 = vpop.f32.mrb[0].mxu0
        %v701 = vadd.f32 0.0, %v700
        %v702 = vpop.f32.mrb[0].mxu0
        %703 = vmatprep.mubr.bf16.mxu0 0
        %704 = vmatmul.mubr.bf16.gmra.mrb[0].mxu0 %v510
        %v705 = vpop.f32.mrb[0].mxu0
        %v706 = vadd.f32 0.0, %v705
        %v707 = vpop.f32.mrb[0].mxu0
        %v708 = vpop.f32.mrb[0].mxu0
        %v709 = vadd.f32 0.0, %v708
        %v710 = vpop.f32.mrb[0].mxu0
        %711 = vmatprep.mubr.bf16.mxu0 0
        %712 = vmatmul.mubr.bf16.gmra.mrb[0].mxu0 %v513
        %v713 = vpop.f32.mrb[0].mxu0
        %v714 = vadd.f32 0.0, %v713
        %v715 = vpop.f32.mrb[0].mxu0
        %v716 = vpop.f32.mrb[0].mxu0
        %v717 = vadd.f32 0.0, %v716
        %v718 = vpop.f32.mrb[0].mxu0
        %719 = vmatprep.mubr.bf16.mxu0 0
        %720 = vmatmul.mubr.bf16.gmra.mrb[0].mxu0 %v516
        %v721 = vpop.f32.mrb[0].mxu0
        %v722 = vadd.f32 0.0, %v721
        %v723 = vpop.f32.mrb[0].mxu0
        %v724 = vpop.f32.mrb[0].mxu0
        %v725 = vadd.f32 0.0, %v724
        %v726 = vpop.f32.mrb[0].mxu0
        %727 = vmatprep.mubr.bf16.mxu0 0
        %728 = vmatmul.mubr.bf16.gmra.mrb[0].mxu0 %v519
        %v729 = vpop.f32.mrb[0].mxu0
        %v730 = vadd.f32 0.0, %v729
        %v731 = vpop.f32.mrb[0].mxu0
        %v732 = vpop.f32.mrb[0].mxu0
        %v733 = vadd.f32 0.0, %v732
        %v734 = vpop.f32.mrb[0].mxu0
        %735 = vmatprep.mubr.bf16.mxu0 0
        %736 = vmatmul.mubr.bf16.gmra.mrb[0].mxu0 %v522
        %v737 = vpop.f32.mrb[0].mxu0
        %v738 = vadd.f32 0.0, %v737
        %v739 = vpop.f32.mrb[0].mxu0
        %v740 = vpop.f32.mrb[0].mxu0
        %v741 = vadd.f32 0.0, %v740
        %v742 = vpop.f32.mrb[0].mxu0
        %743 = vmatprep.mubr.bf16.mxu0 0
        %744 = vmatmul.mubr.bf16.gmra.mrb[0].mxu0 %v525
        %v745 = vpop.f32.mrb[0].mxu0
        %v746 = vadd.f32 0.0, %v745
        %v747 = vpop.f32.mrb[0].mxu0
        %v748 = vpop.f32.mrb[0].mxu0
        %v749 = vadd.f32 0.0, %v748
        %v750 = vpop.f32.mrb[0].mxu0
        %751 = vdwg.mxu0
        %v752 = vld [vmem:[%s4] sm:$0xff]
        %v753 = vld [vmem:[%s4 + $0x8] sm:$0xff]
        %v754 = vld [vmem:[%s4 + $0x10] sm:$0xff]
        %v755 = vld [vmem:[%s4 + $0x18] sm:$0xff]
        %757 = vset.pattern.permute.xlu0 0
        %758 = vperm.xlu0 %757, %v752
        %v759 = vpop.permute.xlu0 %758
        %762 = vset.pattern.permute.xlu0 0
        %763 = vperm.xlu0 %762, %v753
        %v764 = vpop.permute.xlu0 %763
        %767 = vset.pattern.permute.xlu0 0
        %768 = vperm.xlu0 %767, %v754
        %v769 = vpop.permute.xlu0 %768
        %772 = vset.pattern.permute.xlu0 0
        %773 = vperm.xlu0 %772, %v755
        %v774 = vpop.permute.xlu0 %773
        %v776 = vadd.f32 %v224, %v759
        %v777 = vadd.f32 %v225, %v764
        %v778 = vadd.f32 %v226, %v769
        %v779 = vadd.f32 %v227, %v774
        %v780 = vpack.c.bf16 %v565, %v562
        %v781 = vpack.c.bf16 %v573, %v570
        %v782 = vpack.c.bf16 %v629, %v626
        %v783 = vpack.c.bf16 %v637, %v634
        %v784 = vpack.c.bf16 %v693, %v690
        %v785 = vpack.c.bf16 %v701, %v698
        %786 = vxpose.xlu0.c.b16.start [1/8] %v780, 128
        %787 = vxpose.xlu0.c.b16.cont [2/8] %v781, 128
        %788 = vxpose.xlu0.c.b16.cont [3/8] 0, 128
        %789 = vxpose.xlu0.c.b16.cont [4/8] 0, 128
        %790 = vxpose.xlu0.c.b16.cont [5/8] 0, 128
        %791 = vxpose.xlu0.c.b16.cont [6/8] 0, 128
        %792 = vxpose.xlu0.c.b16.cont [7/8] 0, 128
        %793 = vxpose.xlu0.c.b16.end [8/8] 0, 128
        %v794 = vpop.trf.xlu0
        %v795 = vpop.trf.xlu0
        %v796 = vpop.trf.xlu0
        %v797 = vpop.trf.xlu0
        %v798 = vpop.trf.xlu0
        %v799 = vpop.trf.xlu0
        %v800 = vpop.trf.xlu0
        %v801 = vpop.trf.xlu0
        %v803 = vsel %vm454, %v794, 0
        %v806 = vsel %vm454, %v795, 0
        %v809 = vsel %vm454, %v796, 0
        %v812 = vsel %vm454, %v797, 0
        %814 = vmatprep.subr.bf16.mxu0 0
        %815 = vmatpush1.bf16.msra.mxu0 %v782
        %816 = vmatprep.subr.bf16.mxu0 0
        %817 = vmatpush1.bf16.msra.mxu0 %v783
        %818 = vmatprep.subr.bf16.mxu0 0
        %819 = vmatpush1.bf16.msra.mxu0 0
        %820 = vmatprep.subr.bf16.mxu0 0
        %821 = vmatpush1.bf16.msra.mxu0 0
        %822 = vmatprep.subr.bf16.mxu0 0
        %823 = vmatpush1.bf16.msra.mxu0 0
        %824 = vmatprep.subr.bf16.mxu0 0
        %825 = vmatpush1.bf16.msra.mxu0 0
        %826 = vmatprep.subr.bf16.mxu0 0
        %827 = vmatpush1.bf16.msra.mxu0 0
        %828 = vmatprep.subr.bf16.mxu0 0
        %829 = vmatpush1.bf16.msra.mxu0 0
        %830 = vmatprep.subr.bf16.mxu0 0
        %831 = vmatpush1.bf16.msra.mxu0 0
        %832 = vmatprep.subr.bf16.mxu0 0
        %833 = vmatpush1.bf16.msra.mxu0 0
        %834 = vmatprep.subr.bf16.mxu0 0
        %835 = vmatpush1.bf16.msra.mxu0 0
        %836 = vmatprep.subr.bf16.mxu0 0
        %837 = vmatpush1.bf16.msra.mxu0 0
        %838 = vmatprep.subr.bf16.mxu0 0
        %839 = vmatpush1.bf16.msra.mxu0 0
        %840 = vmatprep.subr.bf16.mxu0 0
        %841 = vmatpush1.bf16.msra.mxu0 0
        %842 = vmatprep.subr.bf16.mxu0 0
        %843 = vmatpush1.bf16.msra.mxu0 0
        %844 = vmatprep.subr.bf16.mxu0 0
        %845 = vmatpush1.bf16.msra.mxu0 0
        %846 = vmatprep.mubr.bf16.mxu0 0
        %847 = vmatmul.mubr.bf16.gmra.mrb[0].mxu0 %v803
        %v848 = vpop.f32.mrb[0].mxu0
        %v849 = vadd.f32 0.0, %v848
        %v850 = vpop.f32.mrb[0].mxu0
        %v851 = vpop.f32.mrb[0].mxu0
        %v852 = vadd.f32 0.0, %v851
        %v853 = vpop.f32.mrb[0].mxu0
        %854 = vmatprep.mubr.bf16.mxu0 0
        %855 = vmatmul.mubr.bf16.gmra.mrb[0].mxu0 %v806
        %v856 = vpop.f32.mrb[0].mxu0
        %v857 = vadd.f32 0.0, %v856
        %v858 = vpop.f32.mrb[0].mxu0
        %v859 = vpop.f32.mrb[0].mxu0
        %v860 = vadd.f32 0.0, %v859
        %v861 = vpop.f32.mrb[0].mxu0
        %862 = vmatprep.mubr.bf16.mxu0 0
        %863 = vmatmul.mubr.bf16.gmra.mrb[0].mxu0 %v809
        %v864 = vpop.f32.mrb[0].mxu0
        %v865 = vadd.f32 0.0, %v864
        %v866 = vpop.f32.mrb[0].mxu0
        %v867 = vpop.f32.mrb[0].mxu0
        %v868 = vadd.f32 0.0, %v867
        %v869 = vpop.f32.mrb[0].mxu0
        %870 = vmatprep.mubr.bf16.mxu0 0
        %871 = vmatmul.mubr.bf16.gmra.mrb[0].mxu0 %v812
        %v872 = vpop.f32.mrb[0].mxu0
        %v873 = vadd.f32 0.0, %v872
        %v874 = vpop.f32.mrb[0].mxu0
        %v875 = vpop.f32.mrb[0].mxu0
        %v876 = vadd.f32 0.0, %v875
        %v877 = vpop.f32.mrb[0].mxu0
        %878 = vdwg.mxu0
        %v879 = vsel %vm232, %v849, -inf
        %880 = vmax.xlane.f32.xlu0 %v879
        %v881 = vpop.xlane.xlu0 %880
        %v882 = vsel %vm232, %v852, -inf
        %883 = vmax.xlane.f32.xlu0 %v882
        %v884 = vpop.xlane.xlu0 %883
        %v885 = vsel %vm232, %v857, -inf
        %886 = vmax.xlane.f32.xlu0 %v885
        %v887 = vpop.xlane.xlu0 %886
        %v888 = vsel %vm232, %v860, -inf
        %889 = vmax.xlane.f32.xlu0 %v888
        %v890 = vpop.xlane.xlu0 %889
        %v891 = vsel %vm232, %v865, -inf
        %892 = vmax.xlane.f32.xlu0 %v891
        %v893 = vpop.xlane.xlu0 %892
        %v894 = vsel %vm232, %v868, -inf
        %895 = vmax.xlane.f32.xlu0 %v894
        %v896 = vpop.xlane.xlu0 %895
        %v897 = vsel %vm232, %v873, -inf
        %898 = vmax.xlane.f32.xlu0 %v897
        %v899 = vpop.xlane.xlu0 %898
        %v900 = vsel %vm232, %v876, -inf
        %901 = vmax.xlane.f32.xlu0 %v900
        %v902 = vpop.xlane.xlu0 %901
        %v903 = vsub.f32 %v849, %v881
        %v904 = vsub.f32 %v852, %v884
        %v905 = vsub.f32 %v857, %v887
        %v906 = vsub.f32 %v860, %v890
        %v907 = vsub.f32 %v865, %v893
        %v908 = vsub.f32 %v868, %v896
        %v909 = vsub.f32 %v873, %v899
        %v910 = vsub.f32 %v876, %v902
        %v911 = vmul.f32 %v903, 1.442695
        %v912 = vpow.pop %v911
        %v913 = vmul.f32 %v904, 1.442695
        %v914 = vpow.pop %v913
        %v915 = vmul.f32 %v905, 1.442695
        %v916 = vpow.pop %v915
        %v917 = vmul.f32 %v906, 1.442695
        %v918 = vpow.pop %v917
        %v919 = vmul.f32 %v907, 1.442695
        %v920 = vpow.pop %v919
        %v921 = vmul.f32 %v908, 1.442695
        %v922 = vpow.pop %v921
        %v923 = vmul.f32 %v909, 1.442695
        %v924 = vpow.pop %v923
        %v925 = vmul.f32 %v910, 1.442695
        %v926 = vpow.pop %v925
        %v927 = vsel %vm232, %v912, 0.0
        %928 = vadd.xlane.f32.xlu0 %v927
        %v929 = vpop.xlane.xlu0 %928
        %v930 = vsel %vm232, %v914, 0.0
        %931 = vadd.xlane.f32.xlu0 %v930
        %v932 = vpop.xlane.xlu0 %931
        %v933 = vsel %vm232, %v916, 0.0
        %934 = vadd.xlane.f32.xlu0 %v933
        %v935 = vpop.xlane.xlu0 %934
        %v936 = vsel %vm232, %v918, 0.0
        %937 = vadd.xlane.f32.xlu0 %v936
        %v938 = vpop.xlane.xlu0 %937
        %v939 = vsel %vm232, %v920, 0.0
        %940 = vadd.xlane.f32.xlu0 %v939
        %v941 = vpop.xlane.xlu0 %940
        %v942 = vsel %vm232, %v922, 0.0
        %943 = vadd.xlane.f32.xlu0 %v942
        %v944 = vpop.xlane.xlu0 %943
        %v945 = vsel %vm232, %v924, 0.0
        %946 = vadd.xlane.f32.xlu0 %v945
        %v947 = vpop.xlane.xlu0 %946
        %v948 = vsel %vm232, %v926, 0.0
        %949 = vadd.xlane.f32.xlu0 %v948
        %v950 = vpop.xlane.xlu0 %949
        %v951 = vrcp.pop %v929
        %v952 = vrcp.pop %v932
        %v953 = vrcp.pop %v935
        %v954 = vrcp.pop %v938
        %v955 = vrcp.pop %v941
        %v956 = vrcp.pop %v944
        %v957 = vrcp.pop %v947
        %v958 = vrcp.pop %v950
        %v959 = vmul.f32 %v912, %v951
        %v960 = vmul.f32 %v914, %v952
        %v961 = vmul.f32 %v916, %v953
        %v962 = vmul.f32 %v918, %v954
        %v963 = vmul.f32 %v920, %v955
        %v964 = vmul.f32 %v922, %v956
        %v965 = vmul.f32 %v924, %v957
        %v966 = vmul.f32 %v926, %v958
        %v967 = vpack.c.bf16 %v960, %v959
        %v968 = vpack.c.bf16 %v962, %v961
        %v969 = vpack.c.bf16 %v964, %v963
        %v970 = vpack.c.bf16 %v966, %v965
        %v972 = vsel %vm232, %v784, 0
        %v975 = vsel %vm232, %v785, 0
        %v978 = vsel %vm232, %v967, 0
        %v981 = vsel %vm232, %v968, 0
        %v984 = vsel %vm232, %v969, 0
        %v987 = vsel %vm232, %v970, 0
        %989 = vmatprep.subr.bf16.mxu0 0
        %990 = vmatpush1.bf16.xpose.msra.mxu0 %v978
        %991 = vmatprep.subr.bf16.mxu0 0
        %992 = vmatpush1.bf16.xpose.msra.mxu0 %v981
        %993 = vmatprep.subr.bf16.mxu0 0
        %994 = vmatpush1.bf16.xpose.msra.mxu0 %v984
        %995 = vmatprep.subr.bf16.mxu0 0
        %996 = vmatpush1.bf16.xpose.msra.mxu0 %v987
        %997 = vmatprep.subr.bf16.mxu0 0
        %998 = vmatpush1.bf16.xpose.msra.mxu0 0
        %999 = vmatprep.subr.bf16.mxu0 0
        %1000 = vmatpush1.bf16.xpose.msra.mxu0 0
        %1001 = vmatprep.subr.bf16.mxu0 0
        %1002 = vmatpush1.bf16.xpose.msra.mxu0 0
        %1003 = vmatprep.subr.bf16.mxu0 0
        %1004 = vmatpush1.bf16.xpose.msra.mxu0 0
        %1005 = vmatprep.subr.bf16.mxu0 0
        %1006 = vmatpush1.bf16.xpose.msra.mxu0 0
        %1007 = vmatprep.subr.bf16.mxu0 0
        %1008 = vmatpush1.bf16.xpose.msra.mxu0 0
        %1009 = vmatprep.subr.bf16.mxu0 0
        %1010 = vmatpush1.bf16.xpose.msra.mxu0 0
        %1011 = vmatprep.subr.bf16.mxu0 0
        %1012 = vmatpush1.bf16.xpose.msra.mxu0 0
        %1013 = vmatprep.subr.bf16.mxu0 0
        %1014 = vmatpush1.bf16.xpose.msra.mxu0 0
        %1015 = vmatprep.subr.bf16.mxu0 0
        %1016 = vmatpush1.bf16.xpose.msra.mxu0 0
        %1017 = vmatprep.subr.bf16.mxu0 0
        %1018 = vmatpush1.bf16.xpose.msra.mxu0 0
        %1019 = vmatprep.subr.bf16.mxu0 0
        %1020 = vmatpush1.bf16.xpose.msra.mxu0 0
        %1021 = vmatprep.mubr.bf16.mxu0 0
        %1022 = vmatmul.mubr.bf16.gmra.mrb[0].mxu0 %v972
        %v1023 = vpop.f32.mrb[0].mxu0
        %v1024 = vadd.f32 0.0, %v1023
        %v1025 = vpop.f32.mrb[0].mxu0
        %v1026 = vpop.f32.mrb[0].mxu0
        %v1027 = vadd.f32 0.0, %v1026
        %v1028 = vpop.f32.mrb[0].mxu0
        %1029 = vmatprep.mubr.bf16.mxu0 0
        %1030 = vmatmul.mubr.bf16.gmra.mrb[0].mxu0 %v975
        %v1031 = vpop.f32.mrb[0].mxu0
        %v1032 = vadd.f32 0.0, %v1031
        %v1033 = vpop.f32.mrb[0].mxu0
        %v1034 = vpop.f32.mrb[0].mxu0
        %v1035 = vadd.f32 0.0, %v1034
        %v1036 = vpop.f32.mrb[0].mxu0
        %1037 = vdwg.mxu0
        %v1038 = vld [vmem:[%s3] sm:$0xf]
        %v1039 = vld [vmem:[%s3 + $0x4] sm:$0xf]
        %v1040 = vld [vmem:[%s3 + $0x8] sm:$0xf]
        %v1041 = vld [vmem:[%s3 + $0xc] sm:$0xf]
        %v1042 = vpack.c.bf16 %v1027, %v1024
        %v1043 = vpack.c.bf16 %v1035, %v1032
        %v1048 = vunpack.c.l.b16 %v1038
        %v1049 = vunpack.c.l.b16 %v1039
        %v1050 = vunpack.c.l.b16 %v1040
        %v1051 = vunpack.c.l.b16 %v1041
        %v1052 = vpack.c.b16 %v1049, %v1048
        %v1053 = vpack.c.b16 %v1051, %v1050
        %v1055 = vsel %vm454, %v1052, 0
        %v1058 = vsel %vm454, %v1053, 0
        %1060 = vmatprep.subr.bf16.mxu0 0
        %1061 = vmatpush1.bf16.msra.mxu0 %v1042
        %1062 = vmatprep.subr.bf16.mxu0 0
        %1063 = vmatpush1.bf16.msra.mxu0 %v1043
        %1064 = vmatprep.subr.bf16.mxu0 0
        %1065 = vmatpush1.bf16.msra.mxu0 0
        %1066 = vmatprep.subr.bf16.mxu0 0
        %1067 = vmatpush1.bf16.msra.mxu0 0
        %1068 = vmatprep.subr.bf16.mxu0 0
        %1069 = vmatpush1.bf16.msra.mxu0 0
        %1070 = vmatprep.subr.bf16.mxu0 0
        %1071 = vmatpush1.bf16.msra.mxu0 0
        %1072 = vmatprep.subr.bf16.mxu0 0
        %1073 = vmatpush1.bf16.msra.mxu0 0
        %1074 = vmatprep.subr.bf16.mxu0 0
        %1075 = vmatpush1.bf16.msra.mxu0 0
        %1076 = vmatprep.subr.bf16.mxu0 0
        %1077 = vmatpush1.bf16.msra.mxu0 0
        %1078 = vmatprep.subr.bf16.mxu0 0
        %1079 = vmatpush1.bf16.msra.mxu0 0
        %1080 = vmatprep.subr.bf16.mxu0 0
        %1081 = vmatpush1.bf16.msra.mxu0 0
        %1082 = vmatprep.subr.bf16.mxu0 0
        %1083 = vmatpush1.bf16.msra.mxu0 0
        %1084 = vmatprep.subr.bf16.mxu0 0
        %1085 = vmatpush1.bf16.msra.mxu0 0
        %1086 = vmatprep.subr.bf16.mxu0 0
        %1087 = vmatpush1.bf16.msra.mxu0 0
        %1088 = vmatprep.subr.bf16.mxu0 0
        %1089 = vmatpush1.bf16.msra.mxu0 0
        %1090 = vmatprep.subr.bf16.mxu0 0
        %1091 = vmatpush1.bf16.msra.mxu0 0
        %1092 = vmatprep.mubr.bf16.mxu0 0
        %1093 = vmatmul.mubr.bf16.gmra.mrb[0].mxu0 %v1055
        %v1094 = vpop.f32.mrb[0].mxu0
        %v1095 = vadd.f32 0.0, %v1094
        %v1096 = vpop.f32.mrb[0].mxu0
        %v1097 = vpop.f32.mrb[0].mxu0
        %v1098 = vadd.f32 0.0, %v1097
        %v1099 = vpop.f32.mrb[0].mxu0
        %1100 = vmatprep.mubr.bf16.mxu0 0
        %1101 = vmatmul.mubr.bf16.gmra.mrb[0].mxu0 %v1058
        %v1102 = vpop.f32.mrb[0].mxu0
        %v1103 = vadd.f32 0.0, %v1102
        %v1104 = vpop.f32.mrb[0].mxu0
        %v1105 = vpop.f32.mrb[0].mxu0
        %v1106 = vadd.f32 0.0, %v1105
        %v1107 = vpop.f32.mrb[0].mxu0
        %1108 = vdwg.mxu0
        %v1109 = vadd.f32 %v776, %v1095
        %v1110 = vadd.f32 %v777, %v1098
        %v1111 = vadd.f32 %v778, %v1103
        %v1112 = vadd.f32 %v779, %v1106
        %v1113 = vpack.c.bf16 %v581, %v578
        %v1114 = vpack.c.bf16 %v589, %v586
        %v1115 = vpack.c.bf16 %v645, %v642
        %v1116 = vpack.c.bf16 %v653, %v650
        %v1117 = vpack.c.bf16 %v709, %v706
        %v1118 = vpack.c.bf16 %v717, %v714
        %1119 = vxpose.xlu0.c.b16.start [1/8] %v1113, 128
        %1120 = vxpose.xlu0.c.b16.cont [2/8] %v1114, 128
        %1121 = vxpose.xlu0.c.b16.cont [3/8] 0, 128
        %1122 = vxpose.xlu0.c.b16.cont [4/8] 0, 128
        %1123 = vxpose.xlu0.c.b16.cont [5/8] 0, 128
        %1124 = vxpose.xlu0.c.b16.cont [6/8] 0, 128
        %1125 = vxpose.xlu0.c.b16.cont [7/8] 0, 128
        %1126 = vxpose.xlu0.c.b16.end [8/8] 0, 128
        %v1127 = vpop.trf.xlu0
        %v1128 = vpop.trf.xlu0
        %v1129 = vpop.trf.xlu0
        %v1130 = vpop.trf.xlu0
        %v1131 = vpop.trf.xlu0
        %v1132 = vpop.trf.xlu0
        %v1133 = vpop.trf.xlu0
        %v1134 = vpop.trf.xlu0
        %v1136 = vsel %vm454, %v1127, 0
        %v1139 = vsel %vm454, %v1128, 0
        %v1142 = vsel %vm454, %v1129, 0
        %v1145 = vsel %vm454, %v1130, 0
        %1147 = vmatprep.subr.bf16.mxu0 0
        %1148 = vmatpush1.bf16.msra.mxu0 %v1115
        %1149 = vmatprep.subr.bf16.mxu0 0
        %1150 = vmatpush1.bf16.msra.mxu0 %v1116
        %1151 = vmatprep.subr.bf16.mxu0 0
        %1152 = vmatpush1.bf16.msra.mxu0 0
        %1153 = vmatprep.subr.bf16.mxu0 0
        %1154 = vmatpush1.bf16.msra.mxu0 0
        %1155 = vmatprep.subr.bf16.mxu0 0
        %1156 = vmatpush1.bf16.msra.mxu0 0
        %1157 = vmatprep.subr.bf16.mxu0 0
        %1158 = vmatpush1.bf16.msra.mxu0 0
        %1159 = vmatprep.subr.bf16.mxu0 0
        %1160 = vmatpush1.bf16.msra.mxu0 0
        %1161 = vmatprep.subr.bf16.mxu0 0
        %1162 = vmatpush1.bf16.msra.mxu0 0
        %1163 = vmatprep.subr.bf16.mxu0 0
        %1164 = vmatpush1.bf16.msra.mxu0 0
        %1165 = vmatprep.subr.bf16.mxu0 0
        %1166 = vmatpush1.bf16.msra.mxu0 0
        %1167 = vmatprep.subr.bf16.mxu0 0
        %1168 = vmatpush1.bf16.msra.mxu0 0
        %1169 = vmatprep.subr.bf16.mxu0 0
        %1170 = vmatpush1.bf16.msra.mxu0 0
        %1171 = vmatprep.subr.bf16.mxu0 0
        %1172 = vmatpush1.bf16.msra.mxu0 0
        %1173 = vmatprep.subr.bf16.mxu0 0
        %1174 = vmatpush1.bf16.msra.mxu0 0
        %1175 = vmatprep.subr.bf16.mxu0 0
        %1176 = vmatpush1.bf16.msra.mxu0 0
        %1177 = vmatprep.subr.bf16.mxu0 0
        %1178 = vmatpush1.bf16.msra.mxu0 0
        %1179 = vmatprep.mubr.bf16.mxu0 0
        %1180 = vmatmul.mubr.bf16.gmra.mrb[0].mxu0 %v1136
        %v1181 = vpop.f32.mrb[0].mxu0
        %v1182 = vadd.f32 0.0, %v1181
        %v1183 = vpop.f32.mrb[0].mxu0
        %v1184 = vpop.f32.mrb[0].mxu0
        %v1185 = vadd.f32 0.0, %v1184
        %v1186 = vpop.f32.mrb[0].mxu0
        %1187 = vmatprep.mubr.bf16.mxu0 0
        %1188 = vmatmul.mubr.bf16.gmra.mrb[0].mxu0 %v1139
        %v1189 = vpop.f32.mrb[0].mxu0
        %v1190 = vadd.f32 0.0, %v1189
        %v1191 = vpop.f32.mrb[0].mxu0
        %v1192 = vpop.f32.mrb[0].mxu0
        %v1193 = vadd.f32 0.0, %v1192
        %v1194 = vpop.f32.mrb[0].mxu0
        %1195 = vmatprep.mubr.bf16.mxu0 0
        %1196 = vmatmul.mubr.bf16.gmra.mrb[0].mxu0 %v1142
        %v1197 = vpop.f32.mrb[0].mxu0
        %v1198 = vadd.f32 0.0, %v1197
        %v1199 = vpop.f32.mrb[0].mxu0
        %v1200 = vpop.f32.mrb[0].mxu0
        %v1201 = vadd.f32 0.0, %v1200
        %v1202 = vpop.f32.mrb[0].mxu0
        %1203 = vmatprep.mubr.bf16.mxu0 0
        %1204 = vmatmul.mubr.bf16.gmra.mrb[0].mxu0 %v1145
        %v1205 = vpop.f32.mrb[0].mxu0
        %v1206 = vadd.f32 0.0, %v1205
        %v1207 = vpop.f32.mrb[0].mxu0
        %v1208 = vpop.f32.mrb[0].mxu0
        %v1209 = vadd.f32 0.0, %v1208
        %v1210 = vpop.f32.mrb[0].mxu0
        %1211 = vdwg.mxu0
        %v1212 = vsel %vm232, %v1182, -inf
        %1213 = vmax.xlane.f32.xlu0 %v1212
        %v1214 = vpop.xlane.xlu0 %1213
        %v1215 = vsel %vm232, %v1185, -inf
        %1216 = vmax.xlane.f32.xlu0 %v1215
        %v1217 = vpop.xlane.xlu0 %1216
        %v1218 = vsel %vm232, %v1190, -inf
        %1219 = vmax.xlane.f32.xlu0 %v1218
        %v1220 = vpop.xlane.xlu0 %1219
        %v1221 = vsel %vm232, %v1193, -inf
        %1222 = vmax.xlane.f32.xlu0 %v1221
        %v1223 = vpop.xlane.xlu0 %1222
        %v1224 = vsel %vm232, %v1198, -inf
        %1225 = vmax.xlane.f32.xlu0 %v1224
        %v1226 = vpop.xlane.xlu0 %1225
        %v1227 = vsel %vm232, %v1201, -inf
        %1228 = vmax.xlane.f32.xlu0 %v1227
        %v1229 = vpop.xlane.xlu0 %1228
        %v1230 = vsel %vm232, %v1206, -inf
        %1231 = vmax.xlane.f32.xlu0 %v1230
        %v1232 = vpop.xlane.xlu0 %1231
        %v1233 = vsel %vm232, %v1209, -inf
        %1234 = vmax.xlane.f32.xlu0 %v1233
        %v1235 = vpop.xlane.xlu0 %1234
        %v1236 = vsub.f32 %v1182, %v1214
        %v1237 = vsub.f32 %v1185, %v1217
        %v1238 = vsub.f32 %v1190, %v1220
        %v1239 = vsub.f32 %v1193, %v1223
        %v1240 = vsub.f32 %v1198, %v1226
        %v1241 = vsub.f32 %v1201, %v1229
        %v1242 = vsub.f32 %v1206, %v1232
        %v1243 = vsub.f32 %v1209, %v1235
        %v1244 = vmul.f32 %v1236, 1.442695
        %v1245 = vpow.pop %v1244
        %v1246 = vmul.f32 %v1237, 1.442695
        %v1247 = vpow.pop %v1246
        %v1248 = vmul.f32 %v1238, 1.442695
        %v1249 = vpow.pop %v1248
        %v1250 = vmul.f32 %v1239, 1.442695
        %v1251 = vpow.pop %v1250
        %v1252 = vmul.f32 %v1240, 1.442695
        %v1253 = vpow.pop %v1252
        %v1254 = vmul.f32 %v1241, 1.442695
        %v1255 = vpow.pop %v1254
        %v1256 = vmul.f32 %v1242, 1.442695
        %v1257 = vpow.pop %v1256
        %v1258 = vmul.f32 %v1243, 1.442695
        %v1259 = vpow.pop %v1258
        %v1260 = vsel %vm232, %v1245, 0.0
        %1261 = vadd.xlane.f32.xlu0 %v1260
        %v1262 = vpop.xlane.xlu0 %1261
        %v1263 = vsel %vm232, %v1247, 0.0
        %1264 = vadd.xlane.f32.xlu0 %v1263
        %v1265 = vpop.xlane.xlu0 %1264
        %v1266 = vsel %vm232, %v1249, 0.0
        %1267 = vadd.xlane.f32.xlu0 %v1266
        %v1268 = vpop.xlane.xlu0 %1267
        %v1269 = vsel %vm232, %v1251, 0.0
        %1270 = vadd.xlane.f32.xlu0 %v1269
        %v1271 = vpop.xlane.xlu0 %1270
        %v1272 = vsel %vm232, %v1253, 0.0
        %1273 = vadd.xlane.f32.xlu0 %v1272
        %v1274 = vpop.xlane.xlu0 %1273
        %v1275 = vsel %vm232, %v1255, 0.0
        %1276 = vadd.xlane.f32.xlu0 %v1275
        %v1277 = vpop.xlane.xlu0 %1276
        %v1278 = vsel %vm232, %v1257, 0.0
        %1279 = vadd.xlane.f32.xlu0 %v1278
        %v1280 = vpop.xlane.xlu0 %1279
        %v1281 = vsel %vm232, %v1259, 0.0
        %1282 = vadd.xlane.f32.xlu0 %v1281
        %v1283 = vpop.xlane.xlu0 %1282
        %v1284 = vrcp.pop %v1262
        %v1285 = vrcp.pop %v1265
        %v1286 = vrcp.pop %v1268
        %v1287 = vrcp.pop %v1271
        %v1288 = vrcp.pop %v1274
        %v1289 = vrcp.pop %v1277
        %v1290 = vrcp.pop %v1280
        %v1291 = vrcp.pop %v1283
        %v1292 = vmul.f32 %v1245, %v1284
        %v1293 = vmul.f32 %v1247, %v1285
        %v1294 = vmul.f32 %v1249, %v1286
        %v1295 = vmul.f32 %v1251, %v1287
        %v1296 = vmul.f32 %v1253, %v1288
        %v1297 = vmul.f32 %v1255, %v1289
        %v1298 = vmul.f32 %v1257, %v1290
        %v1299 = vmul.f32 %v1259, %v1291
        %v1300 = vpack.c.bf16 %v1293, %v1292
        %v1301 = vpack.c.bf16 %v1295, %v1294
        %v1302 = vpack.c.bf16 %v1297, %v1296
        %v1303 = vpack.c.bf16 %v1299, %v1298
        %v1305 = vsel %vm232, %v1117, 0
        %v1308 = vsel %vm232, %v1118, 0
        %v1311 = vsel %vm232, %v1300, 0
        %v1314 = vsel %vm232, %v1301, 0
        %v1317 = vsel %vm232, %v1302, 0
        %v1320 = vsel %vm232, %v1303, 0
        %1322 = vmatprep.subr.bf16.mxu0 0
        %1323 = vmatpush1.bf16.xpose.msra.mxu0 %v1311
        %1324 = vmatprep.subr.bf16.mxu0 0
        %1325 = vmatpush1.bf16.xpose.msra.mxu0 %v1314
        %1326 = vmatprep.subr.bf16.mxu0 0
        %1327 = vmatpush1.bf16.xpose.msra.mxu0 %v1317
        %1328 = vmatprep.subr.bf16.mxu0 0
        %1329 = vmatpush1.bf16.xpose.msra.mxu0 %v1320
        %1330 = vmatprep.subr.bf16.mxu0 0
        %1331 = vmatpush1.bf16.xpose.msra.mxu0 0
        %1332 = vmatprep.subr.bf16.mxu0 0
        %1333 = vmatpush1.bf16.xpose.msra.mxu0 0
        %1334 = vmatprep.subr.bf16.mxu0 0
        %1335 = vmatpush1.bf16.xpose.msra.mxu0 0
        %1336 = vmatprep.subr.bf16.mxu0 0
        %1337 = vmatpush1.bf16.xpose.msra.mxu0 0
        %1338 = vmatprep.subr.bf16.mxu0 0
        %1339 = vmatpush1.bf16.xpose.msra.mxu0 0
        %1340 = vmatprep.subr.bf16.mxu0 0
        %1341 = vmatpush1.bf16.xpose.msra.mxu0 0
        %1342 = vmatprep.subr.bf16.mxu0 0
        %1343 = vmatpush1.bf16.xpose.msra.mxu0 0
        %1344 = vmatprep.subr.bf16.mxu0 0
        %1345 = vmatpush1.bf16.xpose.msra.mxu0 0
        %1346 = vmatprep.subr.bf16.mxu0 0
        %1347 = vmatpush1.bf16.xpose.msra.mxu0 0
        %1348 = vmatprep.subr.bf16.mxu0 0
        %1349 = vmatpush1.bf16.xpose.msra.mxu0 0
        %1350 = vmatprep.subr.bf16.mxu0 0
        %1351 = vmatpush1.bf16.xpose.msra.mxu0 0
        %1352 = vmatprep.subr.bf16.mxu0 0
        %1353 = vmatpush1.bf16.xpose.msra.mxu0 0
        %1354 = vmatprep.mubr.bf16.mxu0 0
        %1355 = vmatmul.mubr.bf16.gmra.mrb[0].mxu0 %v1305
        %v1356 = vpop.f32.mrb[0].mxu0
        %v1357 = vadd.f32 0.0, %v1356
        %v1358 = vpop.f32.mrb[0].mxu0
        %v1359 = vpop.f32.mrb[0].mxu0
        %v1360 = vadd.f32 0.0, %v1359
        %v1361 = vpop.f32.mrb[0].mxu0
        %1362 = vmatprep.mubr.bf16.mxu0 0
        %1363 = vmatmul.mubr.bf16.gmra.mrb[0].mxu0 %v1308
        %v1364 = vpop.f32.mrb[0].mxu0
        %v1365 = vadd.f32 0.0, %v1364
        %v1366 = vpop.f32.mrb[0].mxu0
        %v1367 = vpop.f32.mrb[0].mxu0
        %v1368 = vadd.f32 0.0, %v1367
        %v1369 = vpop.f32.mrb[0].mxu0
        %1370 = vdwg.mxu0
        %s1371 = scalar_lea.vmem %s3, 16
        %v1372 = vld [vmem:[%s1371] sm:$0xf]
        %v1373 = vld [vmem:[%s1371 + $0x4] sm:$0xf]
        %v1374 = vld [vmem:[%s1371 + $0x8] sm:$0xf]
        %v1375 = vld [vmem:[%s1371 + $0xc] sm:$0xf]
        %v1376 = vpack.c.bf16 %v1360, %v1357
        %v1377 = vpack.c.bf16 %v1368, %v1365
        %v1382 = vunpack.c.l.b16 %v1372
        %v1383 = vunpack.c.l.b16 %v1373
        %v1384 = vunpack.c.l.b16 %v1374
        %v1385 = vunpack.c.l.b16 %v1375
        %v1386 = vpack.c.b16 %v1383, %v1382
        %v1387 = vpack.c.b16 %v1385, %v1384
        %v1389 = vsel %vm454, %v1386, 0
        %v1392 = vsel %vm454, %v1387, 0
        %1394 = vmatprep.subr.bf16.mxu0 0
        %1395 = vmatpush1.bf16.msra.mxu0 %v1376
        %1396 = vmatprep.subr.bf16.mxu0 0
        %1397 = vmatpush1.bf16.msra.mxu0 %v1377
        %1398 = vmatprep.subr.bf16.mxu0 0
        %1399 = vmatpush1.bf16.msra.mxu0 0
        %1400 = vmatprep.subr.bf16.mxu0 0
        %1401 = vmatpush1.bf16.msra.mxu0 0
        %1402 = vmatprep.subr.bf16.mxu0 0
        %1403 = vmatpush1.bf16.msra.mxu0 0
        %1404 = vmatprep.subr.bf16.mxu0 0
        %1405 = vmatpush1.bf16.msra.mxu0 0
        %1406 = vmatprep.subr.bf16.mxu0 0
        %1407 = vmatpush1.bf16.msra.mxu0 0
        %1408 = vmatprep.subr.bf16.mxu0 0
        %1409 = vmatpush1.bf16.msra.mxu0 0
        %1410 = vmatprep.subr.bf16.mxu0 0
        %1411 = vmatpush1.bf16.msra.mxu0 0
        %1412 = vmatprep.subr.bf16.mxu0 0
        %1413 = vmatpush1.bf16.msra.mxu0 0
        %1414 = vmatprep.subr.bf16.mxu0 0
        %1415 = vmatpush1.bf16.msra.mxu0 0
        %1416 = vmatprep.subr.bf16.mxu0 0
        %1417 = vmatpush1.bf16.msra.mxu0 0
        %1418 = vmatprep.subr.bf16.mxu0 0
        %1419 = vmatpush1.bf16.msra.mxu0 0
        %1420 = vmatprep.subr.bf16.mxu0 0
        %1421 = vmatpush1.bf16.msra.mxu0 0
        %1422 = vmatprep.subr.bf16.mxu0 0
        %1423 = vmatpush1.bf16.msra.mxu0 0
        %1424 = vmatprep.subr.bf16.mxu0 0
        %1425 = vmatpush1.bf16.msra.mxu0 0
        %1426 = vmatprep.mubr.bf16.mxu0 0
        %1427 = vmatmul.mubr.bf16.gmra.mrb[0].mxu0 %v1389
        %v1428 = vpop.f32.mrb[0].mxu0
        %v1429 = vadd.f32 0.0, %v1428
        %v1430 = vpop.f32.mrb[0].mxu0
        %v1431 = vpop.f32.mrb[0].mxu0
        %v1432 = vadd.f32 0.0, %v1431
        %v1433 = vpop.f32.mrb[0].mxu0
        %1434 = vmatprep.mubr.bf16.mxu0 0
        %1435 = vmatmul.mubr.bf16.gmra.mrb[0].mxu0 %v1392
        %v1436 = vpop.f32.mrb[0].mxu0
        %v1437 = vadd.f32 0.0, %v1436
        %v1438 = vpop.f32.mrb[0].mxu0
        %v1439 = vpop.f32.mrb[0].mxu0
        %v1440 = vadd.f32 0.0, %v1439
        %v1441 = vpop.f32.mrb[0].mxu0
        %1442 = vdwg.mxu0
        %v1443 = vadd.f32 %v1109, %v1429
        %v1444 = vadd.f32 %v1110, %v1432
        %v1445 = vadd.f32 %v1111, %v1437
        %v1446 = vadd.f32 %v1112, %v1440
        %v1447 = vpack.c.bf16 %v597, %v594
        %v1448 = vpack.c.bf16 %v605, %v602
        %v1449 = vpack.c.bf16 %v661, %v658
        %v1450 = vpack.c.bf16 %v669, %v666
        %v1451 = vpack.c.bf16 %v725, %v722
        %v1452 = vpack.c.bf16 %v733, %v730
        %1453 = vxpose.xlu0.c.b16.start [1/8] %v1447, 128
        %1454 = vxpose.xlu0.c.b16.cont [2/8] %v1448, 128
        %1455 = vxpose.xlu0.c.b16.cont [3/8] 0, 128
        %1456 = vxpose.xlu0.c.b16.cont [4/8] 0, 128
        %1457 = vxpose.xlu0.c.b16.cont [5/8] 0, 128
        %1458 = vxpose.xlu0.c.b16.cont [6/8] 0, 128
        %1459 = vxpose.xlu0.c.b16.cont [7/8] 0, 128
        %1460 = vxpose.xlu0.c.b16.end [8/8] 0, 128
        %v1461 = vpop.trf.xlu0
        %v1462 = vpop.trf.xlu0
        %v1463 = vpop.trf.xlu0
        %v1464 = vpop.trf.xlu0
        %v1465 = vpop.trf.xlu0
        %v1466 = vpop.trf.xlu0
        %v1467 = vpop.trf.xlu0
        %v1468 = vpop.trf.xlu0
        %v1470 = vsel %vm454, %v1461, 0
        %v1473 = vsel %vm454, %v1462, 0
        %v1476 = vsel %vm454, %v1463, 0
        %v1479 = vsel %vm454, %v1464, 0
        %1481 = vmatprep.subr.bf16.mxu0 0
        %1482 = vmatpush1.bf16.msra.mxu0 %v1449
        %1483 = vmatprep.subr.bf16.mxu0 0
        %1484 = vmatpush1.bf16.msra.mxu0 %v1450
        %1485 = vmatprep.subr.bf16.mxu0 0
        %1486 = vmatpush1.bf16.msra.mxu0 0
        %1487 = vmatprep.subr.bf16.mxu0 0
        %1488 = vmatpush1.bf16.msra.mxu0 0
        %1489 = vmatprep.subr.bf16.mxu0 0
        %1490 = vmatpush1.bf16.msra.mxu0 0
        %1491 = vmatprep.subr.bf16.mxu0 0
        %1492 = vmatpush1.bf16.msra.mxu0 0
        %1493 = vmatprep.subr.bf16.mxu0 0
        %1494 = vmatpush1.bf16.msra.mxu0 0
        %1495 = vmatprep.subr.bf16.mxu0 0
        %1496 = vmatpush1.bf16.msra.mxu0 0
        %1497 = vmatprep.subr.bf16.mxu0 0
        %1498 = vmatpush1.bf16.msra.mxu0 0
        %1499 = vmatprep.subr.bf16.mxu0 0
        %1500 = vmatpush1.bf16.msra.mxu0 0
        %1501 = vmatprep.subr.bf16.mxu0 0
        %1502 = vmatpush1.bf16.msra.mxu0 0
        %1503 = vmatprep.subr.bf16.mxu0 0
        %1504 = vmatpush1.bf16.msra.mxu0 0
        %1505 = vmatprep.subr.bf16.mxu0 0
        %1506 = vmatpush1.bf16.msra.mxu0 0
        %1507 = vmatprep.subr.bf16.mxu0 0
        %1508 = vmatpush1.bf16.msra.mxu0 0
        %1509 = vmatprep.subr.bf16.mxu0 0
        %1510 = vmatpush1.bf16.msra.mxu0 0
        %1511 = vmatprep.subr.bf16.mxu0 0
        %1512 = vmatpush1.bf16.msra.mxu0 0
        %1513 = vmatprep.mubr.bf16.mxu0 0
        %1514 = vmatmul.mubr.bf16.gmra.mrb[0].mxu0 %v1470
        %v1515 = vpop.f32.mrb[0].mxu0
        %v1516 = vadd.f32 0.0, %v1515
        %v1517 = vpop.f32.mrb[0].mxu0
        %v1518 = vpop.f32.mrb[0].mxu0
        %v1519 = vadd.f32 0.0, %v1518
        %v1520 = vpop.f32.mrb[0].mxu0
        %1521 = vmatprep.mubr.bf16.mxu0 0
        %1522 = vmatmul.mubr.bf16.gmra.mrb[0].mxu0 %v1473
        %v1523 = vpop.f32.mrb[0].mxu0
        %v1524 = vadd.f32 0.0, %v1523
        %v1525 = vpop.f32.mrb[0].mxu0
        %v1526 = vpop.f32.mrb[0].mxu0
        %v1527 = vadd.f32 0.0, %v1526
        %v1528 = vpop.f32.mrb[0].mxu0
        %1529 = vmatprep.mubr.bf16.mxu0 0
        %1530 = vmatmul.mubr.bf16.gmra.mrb[0].mxu0 %v1476
        %v1531 = vpop.f32.mrb[0].mxu0
        %v1532 = vadd.f32 0.0, %v1531
        %v1533 = vpop.f32.mrb[0].mxu0
        %v1534 = vpop.f32.mrb[0].mxu0
        %v1535 = vadd.f32 0.0, %v1534
        %v1536 = vpop.f32.mrb[0].mxu0
        %1537 = vmatprep.mubr.bf16.mxu0 0
        %1538 = vmatmul.mubr.bf16.gmra.mrb[0].mxu0 %v1479
        %v1539 = vpop.f32.mrb[0].mxu0
        %v1540 = vadd.f32 0.0, %v1539
        %v1541 = vpop.f32.mrb[0].mxu0
        %v1542 = vpop.f32.mrb[0].mxu0
        %v1543 = vadd.f32 0.0, %v1542
        %v1544 = vpop.f32.mrb[0].mxu0
        %1545 = vdwg.mxu0
        %v1546 = vsel %vm232, %v1516, -inf
        %1547 = vmax.xlane.f32.xlu0 %v1546
        %v1548 = vpop.xlane.xlu0 %1547
        %v1549 = vsel %vm232, %v1519, -inf
        %1550 = vmax.xlane.f32.xlu0 %v1549
        %v1551 = vpop.xlane.xlu0 %1550
        %v1552 = vsel %vm232, %v1524, -inf
        %1553 = vmax.xlane.f32.xlu0 %v1552
        %v1554 = vpop.xlane.xlu0 %1553
        %v1555 = vsel %vm232, %v1527, -inf
        %1556 = vmax.xlane.f32.xlu0 %v1555
        %v1557 = vpop.xlane.xlu0 %1556
        %v1558 = vsel %vm232, %v1532, -inf
        %1559 = vmax.xlane.f32.xlu0 %v1558
        %v1560 = vpop.xlane.xlu0 %1559
        %v1561 = vsel %vm232, %v1535, -inf
        %1562 = vmax.xlane.f32.xlu0 %v1561
        %v1563 = vpop.xlane.xlu0 %1562
        %v1564 = vsel %vm232, %v1540, -inf
        %1565 = vmax.xlane.f32.xlu0 %v1564
        %v1566 = vpop.xlane.xlu0 %1565
        %v1567 = vsel %vm232, %v1543, -inf
        %1568 = vmax.xlane.f32.xlu0 %v1567
        %v1569 = vpop.xlane.xlu0 %1568
        %v1570 = vsub.f32 %v1516, %v1548
        %v1571 = vsub.f32 %v1519, %v1551
        %v1572 = vsub.f32 %v1524, %v1554
        %v1573 = vsub.f32 %v1527, %v1557
        %v1574 = vsub.f32 %v1532, %v1560
        %v1575 = vsub.f32 %v1535, %v1563
        %v1576 = vsub.f32 %v1540, %v1566
        %v1577 = vsub.f32 %v1543, %v1569
        %v1578 = vmul.f32 %v1570, 1.442695
        %v1579 = vpow.pop %v1578
        %v1580 = vmul.f32 %v1571, 1.442695
        %v1581 = vpow.pop %v1580
        %v1582 = vmul.f32 %v1572, 1.442695
        %v1583 = vpow.pop %v1582
        %v1584 = vmul.f32 %v1573, 1.442695
        %v1585 = vpow.pop %v1584
        %v1586 = vmul.f32 %v1574, 1.442695
        %v1587 = vpow.pop %v1586
        %v1588 = vmul.f32 %v1575, 1.442695
        %v1589 = vpow.pop %v1588
        %v1590 = vmul.f32 %v1576, 1.442695
        %v1591 = vpow.pop %v1590
        %v1592 = vmul.f32 %v1577, 1.442695
        %v1593 = vpow.pop %v1592
        %v1594 = vsel %vm232, %v1579, 0.0
        %1595 = vadd.xlane.f32.xlu0 %v1594
        %v1596 = vpop.xlane.xlu0 %1595
        %v1597 = vsel %vm232, %v1581, 0.0
        %1598 = vadd.xlane.f32.xlu0 %v1597
        %v1599 = vpop.xlane.xlu0 %1598
        %v1600 = vsel %vm232, %v1583, 0.0
        %1601 = vadd.xlane.f32.xlu0 %v1600
        %v1602 = vpop.xlane.xlu0 %1601
        %v1603 = vsel %vm232, %v1585, 0.0
        %1604 = vadd.xlane.f32.xlu0 %v1603
        %v1605 = vpop.xlane.xlu0 %1604
        %v1606 = vsel %vm232, %v1587, 0.0
        %1607 = vadd.xlane.f32.xlu0 %v1606
        %v1608 = vpop.xlane.xlu0 %1607
        %v1609 = vsel %vm232, %v1589, 0.0
        %1610 = vadd.xlane.f32.xlu0 %v1609
        %v1611 = vpop.xlane.xlu0 %1610
        %v1612 = vsel %vm232, %v1591, 0.0
        %1613 = vadd.xlane.f32.xlu0 %v1612
        %v1614 = vpop.xlane.xlu0 %1613
        %v1615 = vsel %vm232, %v1593, 0.0
        %1616 = vadd.xlane.f32.xlu0 %v1615
        %v1617 = vpop.xlane.xlu0 %1616
        %v1618 = vrcp.pop %v1596
        %v1619 = vrcp.pop %v1599
        %v1620 = vrcp.pop %v1602
        %v1621 = vrcp.pop %v1605
        %v1622 = vrcp.pop %v1608
        %v1623 = vrcp.pop %v1611
        %v1624 = vrcp.pop %v1614
        %v1625 = vrcp.pop %v1617
        %v1626 = vmul.f32 %v1579, %v1618
        %v1627 = vmul.f32 %v1581, %v1619
        %v1628 = vmul.f32 %v1583, %v1620
        %v1629 = vmul.f32 %v1585, %v1621
        %v1630 = vmul.f32 %v1587, %v1622
        %v1631 = vmul.f32 %v1589, %v1623
        %v1632 = vmul.f32 %v1591, %v1624
        %v1633 = vmul.f32 %v1593, %v1625
        %v1634 = vpack.c.bf16 %v1627, %v1626
        %v1635 = vpack.c.bf16 %v1629, %v1628
        %v1636 = vpack.c.bf16 %v1631, %v1630
        %v1637 = vpack.c.bf16 %v1633, %v1632
        %v1639 = vsel %vm232, %v1451, 0
        %v1642 = vsel %vm232, %v1452, 0
        %v1645 = vsel %vm232, %v1634, 0
        %v1648 = vsel %vm232, %v1635, 0
        %v1651 = vsel %vm232, %v1636, 0
        %v1654 = vsel %vm232, %v1637, 0
        %1656 = vmatprep.subr.bf16.mxu0 0
        %1657 = vmatpush1.bf16.xpose.msra.mxu0 %v1645
        %1658 = vmatprep.subr.bf16.mxu0 0
        %1659 = vmatpush1.bf16.xpose.msra.mxu0 %v1648
        %1660 = vmatprep.subr.bf16.mxu0 0
        %1661 = vmatpush1.bf16.xpose.msra.mxu0 %v1651
        %1662 = vmatprep.subr.bf16.mxu0 0
        %1663 = vmatpush1.bf16.xpose.msra.mxu0 %v1654
        %1664 = vmatprep.subr.bf16.mxu0 0
        %1665 = vmatpush1.bf16.xpose.msra.mxu0 0
        %1666 = vmatprep.subr.bf16.mxu0 0
        %1667 = vmatpush1.bf16.xpose.msra.mxu0 0
        %1668 = vmatprep.subr.bf16.mxu0 0
        %1669 = vmatpush1.bf16.xpose.msra.mxu0 0
        %1670 = vmatprep.subr.bf16.mxu0 0
        %1671 = vmatpush1.bf16.xpose.msra.mxu0 0
        %1672 = vmatprep.subr.bf16.mxu0 0
        %1673 = vmatpush1.bf16.xpose.msra.mxu0 0
        %1674 = vmatprep.subr.bf16.mxu0 0
        %1675 = vmatpush1.bf16.xpose.msra.mxu0 0
        %1676 = vmatprep.subr.bf16.mxu0 0
        %1677 = vmatpush1.bf16.xpose.msra.mxu0 0
        %1678 = vmatprep.subr.bf16.mxu0 0
        %1679 = vmatpush1.bf16.xpose.msra.mxu0 0
        %1680 = vmatprep.subr.bf16.mxu0 0
        %1681 = vmatpush1.bf16.xpose.msra.mxu0 0
        %1682 = vmatprep.subr.bf16.mxu0 0
        %1683 = vmatpush1.bf16.xpose.msra.mxu0 0
        %1684 = vmatprep.subr.bf16.mxu0 0
        %1685 = vmatpush1.bf16.xpose.msra.mxu0 0
        %1686 = vmatprep.subr.bf16.mxu0 0
        %1687 = vmatpush1.bf16.xpose.msra.mxu0 0
        %1688 = vmatprep.mubr.bf16.mxu0 0
        %1689 = vmatmul.mubr.bf16.gmra.mrb[0].mxu0 %v1639
        %v1690 = vpop.f32.mrb[0].mxu0
        %v1691 = vadd.f32 0.0, %v1690
        %v1692 = vpop.f32.mrb[0].mxu0
        %v1693 = vpop.f32.mrb[0].mxu0
        %v1694 = vadd.f32 0.0, %v1693
        %v1695 = vpop.f32.mrb[0].mxu0
        %1696 = vmatprep.mubr.bf16.mxu0 0
        %1697 = vmatmul.mubr.bf16.gmra.mrb[0].mxu0 %v1642
        %v1698 = vpop.f32.mrb[0].mxu0
        %v1699 = vadd.f32 0.0, %v1698
        %v1700 = vpop.f32.mrb[0].mxu0
        %v1701 = vpop.f32.mrb[0].mxu0
        %v1702 = vadd.f32 0.0, %v1701
        %v1703 = vpop.f32.mrb[0].mxu0
        %1704 = vdwg.mxu0
        %s1705 = scalar_lea.vmem %s3, 32
        %v1706 = vld [vmem:[%s1705] sm:$0xf]
        %v1707 = vld [vmem:[%s1705 + $0x4] sm:$0xf]
        %v1708 = vld [vmem:[%s1705 + $0x8] sm:$0xf]
        %v1709 = vld [vmem:[%s1705 + $0xc] sm:$0xf]
        %v1710 = vpack.c.bf16 %v1694, %v1691
        %v1711 = vpack.c.bf16 %v1702, %v1699
        %v1716 = vunpack.c.l.b16 %v1706
        %v1717 = vunpack.c.l.b16 %v1707
        %v1718 = vunpack.c.l.b16 %v1708
        %v1719 = vunpack.c.l.b16 %v1709
        %v1720 = vpack.c.b16 %v1717, %v1716
        %v1721 = vpack.c.b16 %v1719, %v1718
        %v1723 = vsel %vm454, %v1720, 0
        %v1726 = vsel %vm454, %v1721, 0
        %1728 = vmatprep.subr.bf16.mxu0 0
        %1729 = vmatpush1.bf16.msra.mxu0 %v1710
        %1730 = vmatprep.subr.bf16.mxu0 0
        %1731 = vmatpush1.bf16.msra.mxu0 %v1711
        %1732 = vmatprep.subr.bf16.mxu0 0
        %1733 = vmatpush1.bf16.msra.mxu0 0
        %1734 = vmatprep.subr.bf16.mxu0 0
        %1735 = vmatpush1.bf16.msra.mxu0 0
        %1736 = vmatprep.subr.bf16.mxu0 0
        %1737 = vmatpush1.bf16.msra.mxu0 0
        %1738 = vmatprep.subr.bf16.mxu0 0
        %1739 = vmatpush1.bf16.msra.mxu0 0
        %1740 = vmatprep.subr.bf16.mxu0 0
        %1741 = vmatpush1.bf16.msra.mxu0 0
        %1742 = vmatprep.subr.bf16.mxu0 0
        %1743 = vmatpush1.bf16.msra.mxu0 0
        %1744 = vmatprep.subr.bf16.mxu0 0
        %1745 = vmatpush1.bf16.msra.mxu0 0
        %1746 = vmatprep.subr.bf16.mxu0 0
        %1747 = vmatpush1.bf16.msra.mxu0 0
        %1748 = vmatprep.subr.bf16.mxu0 0
        %1749 = vmatpush1.bf16.msra.mxu0 0
        %1750 = vmatprep.subr.bf16.mxu0 0
        %1751 = vmatpush1.bf16.msra.mxu0 0
        %1752 = vmatprep.subr.bf16.mxu0 0
        %1753 = vmatpush1.bf16.msra.mxu0 0
        %1754 = vmatprep.subr.bf16.mxu0 0
        %1755 = vmatpush1.bf16.msra.mxu0 0
        %1756 = vmatprep.subr.bf16.mxu0 0
        %1757 = vmatpush1.bf16.msra.mxu0 0
        %1758 = vmatprep.subr.bf16.mxu0 0
        %1759 = vmatpush1.bf16.msra.mxu0 0
        %1760 = vmatprep.mubr.bf16.mxu0 0
        %1761 = vmatmul.mubr.bf16.gmra.mrb[0].mxu0 %v1723
        %v1762 = vpop.f32.mrb[0].mxu0
        %v1763 = vadd.f32 0.0, %v1762
        %v1764 = vpop.f32.mrb[0].mxu0
        %v1765 = vpop.f32.mrb[0].mxu0
        %v1766 = vadd.f32 0.0, %v1765
        %v1767 = vpop.f32.mrb[0].mxu0
        %1768 = vmatprep.mubr.bf16.mxu0 0
        %1769 = vmatmul.mubr.bf16.gmra.mrb[0].mxu0 %v1726
        %v1770 = vpop.f32.mrb[0].mxu0
        %v1771 = vadd.f32 0.0, %v1770
        %v1772 = vpop.f32.mrb[0].mxu0
        %v1773 = vpop.f32.mrb[0].mxu0
        %v1774 = vadd.f32 0.0, %v1773
        %v1775 = vpop.f32.mrb[0].mxu0
        %1776 = vdwg.mxu0
        %v1777 = vadd.f32 %v1443, %v1763
        %v1778 = vadd.f32 %v1444, %v1766
        %v1779 = vadd.f32 %v1445, %v1771
        %v1780 = vadd.f32 %v1446, %v1774
        %v1781 = vpack.c.bf16 %v613, %v610
        %v1782 = vpack.c.bf16 %v621, %v618
        %v1783 = vpack.c.bf16 %v677, %v674
        %v1784 = vpack.c.bf16 %v685, %v682
        %v1785 = vpack.c.bf16 %v741, %v738
        %v1786 = vpack.c.bf16 %v749, %v746
        %1787 = vxpose.xlu0.c.b16.start [1/8] %v1781, 128
        %1788 = vxpose.xlu0.c.b16.cont [2/8] %v1782, 128
        %1789 = vxpose.xlu0.c.b16.cont [3/8] 0, 128
        %1790 = vxpose.xlu0.c.b16.cont [4/8] 0, 128
        %1791 = vxpose.xlu0.c.b16.cont [5/8] 0, 128
        %1792 = vxpose.xlu0.c.b16.cont [6/8] 0, 128
        %1793 = vxpose.xlu0.c.b16.cont [7/8] 0, 128
        %1794 = vxpose.xlu0.c.b16.end [8/8] 0, 128
        %v1795 = vpop.trf.xlu0
        %v1796 = vpop.trf.xlu0
        %v1797 = vpop.trf.xlu0
        %v1798 = vpop.trf.xlu0
        %v1799 = vpop.trf.xlu0
        %v1800 = vpop.trf.xlu0
        %v1801 = vpop.trf.xlu0
        %v1802 = vpop.trf.xlu0
        %v1804 = vsel %vm454, %v1795, 0
        %v1807 = vsel %vm454, %v1796, 0
        %v1810 = vsel %vm454, %v1797, 0
        %v1813 = vsel %vm454, %v1798, 0
        %1815 = vmatprep.subr.bf16.mxu0 0
        %1816 = vmatpush1.bf16.msra.mxu0 %v1783
        %1817 = vmatprep.subr.bf16.mxu0 0
        %1818 = vmatpush1.bf16.msra.mxu0 %v1784
        %1819 = vmatprep.subr.bf16.mxu0 0
        %1820 = vmatpush1.bf16.msra.mxu0 0
        %1821 = vmatprep.subr.bf16.mxu0 0
        %1822 = vmatpush1.bf16.msra.mxu0 0
        %1823 = vmatprep.subr.bf16.mxu0 0
        %1824 = vmatpush1.bf16.msra.mxu0 0
        %1825 = vmatprep.subr.bf16.mxu0 0
        %1826 = vmatpush1.bf16.msra.mxu0 0
        %1827 = vmatprep.subr.bf16.mxu0 0
        %1828 = vmatpush1.bf16.msra.mxu0 0
        %1829 = vmatprep.subr.bf16.mxu0 0
        %1830 = vmatpush1.bf16.msra.mxu0 0
        %1831 = vmatprep.subr.bf16.mxu0 0
        %1832 = vmatpush1.bf16.msra.mxu0 0
        %1833 = vmatprep.subr.bf16.mxu0 0
        %1834 = vmatpush1.bf16.msra.mxu0 0
        %1835 = vmatprep.subr.bf16.mxu0 0
        %1836 = vmatpush1.bf16.msra.mxu0 0
        %1837 = vmatprep.subr.bf16.mxu0 0
        %1838 = vmatpush1.bf16.msra.mxu0 0
        %1839 = vmatprep.subr.bf16.mxu0 0
        %1840 = vmatpush1.bf16.msra.mxu0 0
        %1841 = vmatprep.subr.bf16.mxu0 0
        %1842 = vmatpush1.bf16.msra.mxu0 0
        %1843 = vmatprep.subr.bf16.mxu0 0
        %1844 = vmatpush1.bf16.msra.mxu0 0
        %1845 = vmatprep.subr.bf16.mxu0 0
        %1846 = vmatpush1.bf16.msra.mxu0 0
        %1847 = vmatprep.mubr.bf16.mxu0 0
        %1848 = vmatmul.mubr.bf16.gmra.mrb[0].mxu0 %v1804
        %v1849 = vpop.f32.mrb[0].mxu0
        %v1850 = vadd.f32 0.0, %v1849
        %v1851 = vpop.f32.mrb[0].mxu0
        %v1852 = vpop.f32.mrb[0].mxu0
        %v1853 = vadd.f32 0.0, %v1852
        %v1854 = vpop.f32.mrb[0].mxu0
        %1855 = vmatprep.mubr.bf16.mxu0 0
        %1856 = vmatmul.mubr.bf16.gmra.mrb[0].mxu0 %v1807
        %v1857 = vpop.f32.mrb[0].mxu0
        %v1858 = vadd.f32 0.0, %v1857
        %v1859 = vpop.f32.mrb[0].mxu0
        %v1860 = vpop.f32.mrb[0].mxu0
        %v1861 = vadd.f32 0.0, %v1860
        %v1862 = vpop.f32.mrb[0].mxu0
        %1863 = vmatprep.mubr.bf16.mxu0 0
        %1864 = vmatmul.mubr.bf16.gmra.mrb[0].mxu0 %v1810
        %v1865 = vpop.f32.mrb[0].mxu0
        %v1866 = vadd.f32 0.0, %v1865
        %v1867 = vpop.f32.mrb[0].mxu0
        %v1868 = vpop.f32.mrb[0].mxu0
        %v1869 = vadd.f32 0.0, %v1868
        %v1870 = vpop.f32.mrb[0].mxu0
        %1871 = vmatprep.mubr.bf16.mxu0 0
        %1872 = vmatmul.mubr.bf16.gmra.mrb[0].mxu0 %v1813
        %v1873 = vpop.f32.mrb[0].mxu0
        %v1874 = vadd.f32 0.0, %v1873
        %v1875 = vpop.f32.mrb[0].mxu0
        %v1876 = vpop.f32.mrb[0].mxu0
        %v1877 = vadd.f32 0.0, %v1876
        %v1878 = vpop.f32.mrb[0].mxu0
        %1879 = vdwg.mxu0
        %v1880 = vsel %vm232, %v1850, -inf
        %1881 = vmax.xlane.f32.xlu0 %v1880
        %v1882 = vpop.xlane.xlu0 %1881
        %v1883 = vsel %vm232, %v1853, -inf
        %1884 = vmax.xlane.f32.xlu0 %v1883
        %v1885 = vpop.xlane.xlu0 %1884
        %v1886 = vsel %vm232, %v1858, -inf
        %1887 = vmax.xlane.f32.xlu0 %v1886
        %v1888 = vpop.xlane.xlu0 %1887
        %v1889 = vsel %vm232, %v1861, -inf
        %1890 = vmax.xlane.f32.xlu0 %v1889
        %v1891 = vpop.xlane.xlu0 %1890
        %v1892 = vsel %vm232, %v1866, -inf
        %1893 = vmax.xlane.f32.xlu0 %v1892
        %v1894 = vpop.xlane.xlu0 %1893
        %v1895 = vsel %vm232, %v1869, -inf
        %1896 = vmax.xlane.f32.xlu0 %v1895
        %v1897 = vpop.xlane.xlu0 %1896
        %v1898 = vsel %vm232, %v1874, -inf
        %1899 = vmax.xlane.f32.xlu0 %v1898
        %v1900 = vpop.xlane.xlu0 %1899
        %v1901 = vsel %vm232, %v1877, -inf
        %1902 = vmax.xlane.f32.xlu0 %v1901
        %v1903 = vpop.xlane.xlu0 %1902
        %v1904 = vsub.f32 %v1850, %v1882
        %v1905 = vsub.f32 %v1853, %v1885
        %v1906 = vsub.f32 %v1858, %v1888
        %v1907 = vsub.f32 %v1861, %v1891
        %v1908 = vsub.f32 %v1866, %v1894
        %v1909 = vsub.f32 %v1869, %v1897
        %v1910 = vsub.f32 %v1874, %v1900
        %v1911 = vsub.f32 %v1877, %v1903
        %v1912 = vmul.f32 %v1904, 1.442695
        %v1913 = vpow.pop %v1912
        %v1914 = vmul.f32 %v1905, 1.442695
        %v1915 = vpow.pop %v1914
        %v1916 = vmul.f32 %v1906, 1.442695
        %v1917 = vpow.pop %v1916
        %v1918 = vmul.f32 %v1907, 1.442695
        %v1919 = vpow.pop %v1918
        %v1920 = vmul.f32 %v1908, 1.442695
        %v1921 = vpow.pop %v1920
        %v1922 = vmul.f32 %v1909, 1.442695
        %v1923 = vpow.pop %v1922
        %v1924 = vmul.f32 %v1910, 1.442695
        %v1925 = vpow.pop %v1924
        %v1926 = vmul.f32 %v1911, 1.442695
        %v1927 = vpow.pop %v1926
        %v1928 = vsel %vm232, %v1913, 0.0
        %1929 = vadd.xlane.f32.xlu0 %v1928
        %v1930 = vpop.xlane.xlu0 %1929
        %v1931 = vsel %vm232, %v1915, 0.0
        %1932 = vadd.xlane.f32.xlu0 %v1931
        %v1933 = vpop.xlane.xlu0 %1932
        %v1934 = vsel %vm232, %v1917, 0.0
        %1935 = vadd.xlane.f32.xlu0 %v1934
        %v1936 = vpop.xlane.xlu0 %1935
        %v1937 = vsel %vm232, %v1919, 0.0
        %1938 = vadd.xlane.f32.xlu0 %v1937
        %v1939 = vpop.xlane.xlu0 %1938
        %v1940 = vsel %vm232, %v1921, 0.0
        %1941 = vadd.xlane.f32.xlu0 %v1940
        %v1942 = vpop.xlane.xlu0 %1941
        %v1943 = vsel %vm232, %v1923, 0.0
        %1944 = vadd.xlane.f32.xlu0 %v1943
        %v1945 = vpop.xlane.xlu0 %1944
        %v1946 = vsel %vm232, %v1925, 0.0
        %1947 = vadd.xlane.f32.xlu0 %v1946
        %v1948 = vpop.xlane.xlu0 %1947
        %v1949 = vsel %vm232, %v1927, 0.0
        %1950 = vadd.xlane.f32.xlu0 %v1949
        %v1951 = vpop.xlane.xlu0 %1950
        %v1952 = vrcp.pop %v1930
        %v1953 = vrcp.pop %v1933
        %v1954 = vrcp.pop %v1936
        %v1955 = vrcp.pop %v1939
        %v1956 = vrcp.pop %v1942
        %v1957 = vrcp.pop %v1945
        %v1958 = vrcp.pop %v1948
        %v1959 = vrcp.pop %v1951
        %v1960 = vmul.f32 %v1913, %v1952
        %v1961 = vmul.f32 %v1915, %v1953
        %v1962 = vmul.f32 %v1917, %v1954
        %v1963 = vmul.f32 %v1919, %v1955
        %v1964 = vmul.f32 %v1921, %v1956
        %v1965 = vmul.f32 %v1923, %v1957
        %v1966 = vmul.f32 %v1925, %v1958
        %v1967 = vmul.f32 %v1927, %v1959
        %v1968 = vpack.c.bf16 %v1961, %v1960
        %v1969 = vpack.c.bf16 %v1963, %v1962
        %v1970 = vpack.c.bf16 %v1965, %v1964
        %v1971 = vpack.c.bf16 %v1967, %v1966
        %v1973 = vsel %vm232, %v1785, 0
        %v1976 = vsel %vm232, %v1786, 0
        %v1979 = vsel %vm232, %v1968, 0
        %v1982 = vsel %vm232, %v1969, 0
        %v1985 = vsel %vm232, %v1970, 0
        %v1988 = vsel %vm232, %v1971, 0
        %1990 = vmatprep.subr.bf16.mxu0 0
        %1991 = vmatpush1.bf16.xpose.msra.mxu0 %v1979
        %1992 = vmatprep.subr.bf16.mxu0 0
        %1993 = vmatpush1.bf16.xpose.msra.mxu0 %v1982
        %1994 = vmatprep.subr.bf16.mxu0 0
        %1995 = vmatpush1.bf16.xpose.msra.mxu0 %v1985
        %1996 = vmatprep.subr.bf16.mxu0 0
        %1997 = vmatpush1.bf16.xpose.msra.mxu0 %v1988
        %1998 = vmatprep.subr.bf16.mxu0 0
        %1999 = vmatpush1.bf16.xpose.msra.mxu0 0
        %2000 = vmatprep.subr.bf16.mxu0 0
        %2001 = vmatpush1.bf16.xpose.msra.mxu0 0
        %2002 = vmatprep.subr.bf16.mxu0 0
        %2003 = vmatpush1.bf16.xpose.msra.mxu0 0
        %2004 = vmatprep.subr.bf16.mxu0 0
        %2005 = vmatpush1.bf16.xpose.msra.mxu0 0
        %2006 = vmatprep.subr.bf16.mxu0 0
        %2007 = vmatpush1.bf16.xpose.msra.mxu0 0
        %2008 = vmatprep.subr.bf16.mxu0 0
        %2009 = vmatpush1.bf16.xpose.msra.mxu0 0
        %2010 = vmatprep.subr.bf16.mxu0 0
        %2011 = vmatpush1.bf16.xpose.msra.mxu0 0
        %2012 = vmatprep.subr.bf16.mxu0 0
        %2013 = vmatpush1.bf16.xpose.msra.mxu0 0
        %2014 = vmatprep.subr.bf16.mxu0 0
        %2015 = vmatpush1.bf16.xpose.msra.mxu0 0
        %2016 = vmatprep.subr.bf16.mxu0 0
        %2017 = vmatpush1.bf16.xpose.msra.mxu0 0
        %2018 = vmatprep.subr.bf16.mxu0 0
        %2019 = vmatpush1.bf16.xpose.msra.mxu0 0
        %2020 = vmatprep.subr.bf16.mxu0 0
        %2021 = vmatpush1.bf16.xpose.msra.mxu0 0
        %2022 = vmatprep.mubr.bf16.mxu0 0
        %2023 = vmatmul.mubr.bf16.gmra.mrb[0].mxu0 %v1973
        %v2024 = vpop.f32.mrb[0].mxu0
        %v2025 = vadd.f32 0.0, %v2024
        %v2026 = vpop.f32.mrb[0].mxu0
        %v2027 = vpop.f32.mrb[0].mxu0
        %v2028 = vadd.f32 0.0, %v2027
        %v2029 = vpop.f32.mrb[0].mxu0
        %2030 = vmatprep.mubr.bf16.mxu0 0
        %2031 = vmatmul.mubr.bf16.gmra.mrb[0].mxu0 %v1976
        %v2032 = vpop.f32.mrb[0].mxu0
        %v2033 = vadd.f32 0.0, %v2032
        %v2034 = vpop.f32.mrb[0].mxu0
        %v2035 = vpop.f32.mrb[0].mxu0
        %v2036 = vadd.f32 0.0, %v2035
        %v2037 = vpop.f32.mrb[0].mxu0
        %2038 = vdwg.mxu0
        %s2039 = scalar_lea.vmem %s3, 48
        %v2040 = vld [vmem:[%s2039] sm:$0xf]
        %v2041 = vld [vmem:[%s2039 + $0x4] sm:$0xf]
        %v2042 = vld [vmem:[%s2039 + $0x8] sm:$0xf]
        %v2043 = vld [vmem:[%s2039 + $0xc] sm:$0xf]
        %v2044 = vpack.c.bf16 %v2028, %v2025
        %v2045 = vpack.c.bf16 %v2036, %v2033
        %v2050 = vunpack.c.l.b16 %v2040
        %v2051 = vunpack.c.l.b16 %v2041
        %v2052 = vunpack.c.l.b16 %v2042
        %v2053 = vunpack.c.l.b16 %v2043
        %v2054 = vpack.c.b16 %v2051, %v2050
        %v2055 = vpack.c.b16 %v2053, %v2052
        %v2057 = vsel %vm454, %v2054, 0
        %v2060 = vsel %vm454, %v2055, 0
        %2062 = vmatprep.subr.bf16.mxu0 0
        %2063 = vmatpush1.bf16.msra.mxu0 %v2044
        %2064 = vmatprep.subr.bf16.mxu0 0
        %2065 = vmatpush1.bf16.msra.mxu0 %v2045
        %2066 = vmatprep.subr.bf16.mxu0 0
        %2067 = vmatpush1.bf16.msra.mxu0 0
        %2068 = vmatprep.subr.bf16.mxu0 0
        %2069 = vmatpush1.bf16.msra.mxu0 0
        %2070 = vmatprep.subr.bf16.mxu0 0
        %2071 = vmatpush1.bf16.msra.mxu0 0
        %2072 = vmatprep.subr.bf16.mxu0 0
        %2073 = vmatpush1.bf16.msra.mxu0 0
        %2074 = vmatprep.subr.bf16.mxu0 0
        %2075 = vmatpush1.bf16.msra.mxu0 0
        %2076 = vmatprep.subr.bf16.mxu0 0
        %2077 = vmatpush1.bf16.msra.mxu0 0
        %2078 = vmatprep.subr.bf16.mxu0 0
        %2079 = vmatpush1.bf16.msra.mxu0 0
        %2080 = vmatprep.subr.bf16.mxu0 0
        %2081 = vmatpush1.bf16.msra.mxu0 0
        %2082 = vmatprep.subr.bf16.mxu0 0
        %2083 = vmatpush1.bf16.msra.mxu0 0
        %2084 = vmatprep.subr.bf16.mxu0 0
        %2085 = vmatpush1.bf16.msra.mxu0 0
        %2086 = vmatprep.subr.bf16.mxu0 0
        %2087 = vmatpush1.bf16.msra.mxu0 0
        %2088 = vmatprep.subr.bf16.mxu0 0
        %2089 = vmatpush1.bf16.msra.mxu0 0
        %2090 = vmatprep.subr.bf16.mxu0 0
        %2091 = vmatpush1.bf16.msra.mxu0 0
        %2092 = vmatprep.subr.bf16.mxu0 0
        %2093 = vmatpush1.bf16.msra.mxu0 0
        %2094 = vmatprep.mubr.bf16.mxu0 0
        %2095 = vmatmul.mubr.bf16.gmra.mrb[0].mxu0 %v2057
        %v2096 = vpop.f32.mrb[0].mxu0
        %v2097 = vadd.f32 0.0, %v2096
        %v2098 = vpop.f32.mrb[0].mxu0
        %v2099 = vpop.f32.mrb[0].mxu0
        %v2100 = vadd.f32 0.0, %v2099
        %v2101 = vpop.f32.mrb[0].mxu0
        %2102 = vmatprep.mubr.bf16.mxu0 0
        %2103 = vmatmul.mubr.bf16.gmra.mrb[0].mxu0 %v2060
        %v2104 = vpop.f32.mrb[0].mxu0
        %v2105 = vadd.f32 0.0, %v2104
        %v2106 = vpop.f32.mrb[0].mxu0
        %v2107 = vpop.f32.mrb[0].mxu0
        %v2108 = vadd.f32 0.0, %v2107
        %v2109 = vpop.f32.mrb[0].mxu0
        %2110 = vdwg.mxu0
        %v2111 = vadd.f32 %v1777, %v2097
        %v2112 = vadd.f32 %v1778, %v2100
        %v2113 = vadd.f32 %v1779, %v2105
        %v2114 = vadd.f32 %v1780, %v2108
        %2115 = vst.msk [vmem:[%s217] sm:$0xff] %vm232, %v2111
        %2116 = vst.msk [vmem:[%s217 + $0x8] sm:$0xff] %vm232, %v2112
        %2117 = vst.msk [vmem:[%s217 + $0x10] sm:$0xff] %vm232, %v2113
        %2118 = vst.msk [vmem:[%s217 + $0x18] sm:$0xff] %vm232, %v2114
        %s2119 = sand.u32 %s137, 1
        %s2120 = scalar_lea.sflag [#allocation3], %s2119
        %s2121 = sand.u32 %s137, 1
        %s2122 = smul.addr %s2121, 32
        %s2123 = scalar_lea.vmem [#allocation2], %s2122
        // Predicated region
        $region41: #{tpu_custom_call.1} parent=39 // pred_check
          %p2124 = pneg %p147
        $region42: #{tpu_custom_call.1} parent=39 // pred_check_branch
          %2126 = sbr.rel (%p2124) target = $region44
        $region43: #{tpu_custom_call.1} parent=39 // pred_region
          %s2128 = ssub.s32 512, 512
          %2129 = vsyncadd %s2120, %s2128
          %s2130 = smul.addr %s19, 4
          %s2131 = smul.addr %s2130, 128
          %s2132 = scalar_lea.hbm %s5, %s2131
          %s2133 = sshll.u32 %s2123, 4
          %s2134 = int_to_ptr.vmem [resolvable:$true] %s2133
          %2139 = dma.vmem_to_hbm [thread:$0]  %s2134, 512, %s2132, %s2120, 128, 128, 8
        $region44: #{tpu_custom_call.1} parent=39 // pred_fallthru
          _
      $region40: #{tpu_custom_call.1} parent=5 // pred_fallthru
        _
      %p2140 = scmp.le.s32.totalorder 2, %s14
      // Predicated region
      $region45: #{tpu_custom_call.1} parent=5 // pred_check
        %p2141 = pneg %p2140
      $region46: #{tpu_custom_call.1} parent=5 // pred_check_branch
        %2143 = sbr.rel (%p2141) target = $region48
      $region47: #{tpu_custom_call.1} parent=5 // pred_region
        %s2144 = ssub.s32 %s14, 2
        // Predicated region
        $region49: #{tpu_custom_call.1} parent=47 // pred_check
          %p2145 = pneg %p153
        $region50: #{tpu_custom_call.1} parent=47 // pred_check_branch
          %2147 = sbr.rel (%p2145) target = $region52
        $region51: #{tpu_custom_call.1} parent=47 // pred_region
          %s2148 = sand.u32 %s138, 1
          %s2149 = scalar_lea.sflag [#allocation3], %s2148
          %s2150 = sand.u32 %s138, 1
          %s2151 = smul.addr %s2150, 32
          %s2152 = scalar_lea.vmem [#allocation2], %s2151
          %2153 = dma.done %s2149, 512
        $region52: #{tpu_custom_call.1} parent=47 // pred_fallthru
          _
      $region48: #{tpu_custom_call.1} parent=5 // pred_fallthru
        _
    $region6: #{tpu_custom_call.1} parent=1 // loop_footer
      %s18 = sadd.s32 1, %s14
    $region7: #{tpu_custom_call.1} parent=1 // loop_footer_branch
      %13 = sbr.rel target = $region3
    $region8: #{tpu_custom_call.1} parent=1 // loop_exit
      _
    %2154 = vsyncpa [#allocation3], 1
    %s2155 = scalar_lea.sflag [#allocation3], 1
    %2156 = vsyncpa %s2155, 1

</llo_original>
